<compile_context>
chip_gen: v7x
topology: tpu7x:2x2x1
jax: 0.10.0
libtpu: 0.0.40
codegen_flags: <defaults>
</compile_context>

<pallas_src>
import numpy as np

import jax
import jax.numpy as jnp
from jax import lax
from jax.experimental import pallas as pl
from jax.experimental.pallas import tpu as pltpu


def _conv3x3_folded(x_cf, w2d, masks_ref, slab_ref, shifts):
    """3x3 stride-1 SAME conv, channels-first, spatial flattened into lanes.

    x_cf:      (Cin, H*W) float32 activation (p = h*W + w in lanes).
    w2d:       (Cout, 9*Cin) weight, column order (kh, kw, ci).
    masks_ref: (9, H*W) float32 validity masks (0/1), tap order kh*3+kw.
    slab_ref:  (9*Cin, H*W) VMEM scratch (fully overwritten, no init needed).
    shifts:    list of 9 flat-index deltas (dh*W + dw), tap order kh*3+kw.
    """
    cin = x_cf.shape[0]
    for t, s in enumerate(shifts):
        shifted = x_cf if s == 0 else jnp.roll(x_cf, -s, axis=1)
        slab_ref[t * cin:(t + 1) * cin, :] = shifted * masks_ref[t:t + 1, :]
    return jnp.dot(w2d, slab_ref[...], preferred_element_type=jnp.float32)


def _make_kernel(H, W, C):
    # flat-index shift for each of the nine taps, order (kh, kw)
    shifts = [(kh - 1) * W + (kw - 1) for kh in range(3) for kw in range(3)]

    def kernel(x_ref, w1_ref, w2_ref, wg_ref, wth_ref, wph_ref, ww_ref,
               masks_ref, a_ref, out_ref, slab_ref):
        a = a_ref[0]                                   # shared PReLU slope

        def prelu(v):
            return jnp.where(v >= 0, v, a * v)

        x = x_ref[0, :, :].astype(jnp.float32)         # (C, HW)

        # ---- conv1: 3x3, pad 1, no bias (residual branch) ------------------
        y1 = _conv3x3_folded(x, w1_ref[...], masks_ref, slab_ref, shifts)
        o = prelu(y1)

        # ---- NonLocalBlock2D ------------------------------------------------
        theta = jnp.dot(wth_ref[...], o, preferred_element_type=jnp.float32)
        phi = jnp.dot(wph_ref[...], o, preferred_element_type=jnp.float32)
        g = jnp.dot(wg_ref[...], o, preferred_element_type=jnp.float32)

        # fT[j, i] = f[i, j] = sum_c theta[c, i] * phi[c, j]      (HW x HW)
        fT = lax.dot_general(phi, theta, (((0,), (0,)), ((), ())),
                             preferred_element_type=jnp.float32)
        # torch softmax(f, dim=1) == softmax over i == last axis of fT.
        m = jnp.max(fT, axis=-1, keepdims=True)
        e = jnp.exp(fT - m)
        smT = e / jnp.sum(e, axis=-1, keepdims=True)   # smT[j, i] = sm[i, j]

        # y_nl[c, i] = sum_j g[c, j] * sm[i, j]
        y_nl = jnp.dot(g, smT, preferred_element_type=jnp.float32)     # (C, HW)
        w_y = jnp.dot(ww_ref[...], y_nl, preferred_element_type=jnp.float32)

        out1 = w_y + o + y1                            # (W_y + o) + residual y1

        # ---- conv2 (BasicConv: conv only, relu=False, bn=False) -------------
        y2 = _conv3x3_folded(out1, w2_ref[...], masks_ref, slab_ref, shifts)
        out_ref[0, :, :] = prelu(y2).astype(out_ref.dtype)

    return kernel


def _tap_masks(H, W):
    """(9, H*W) float32 0/1 masks: tap (kh, kw) valid iff the shifted source
    pixel lies inside the image (implements the zero padding)."""
    hh, ww = np.divmod(np.arange(H * W), W)
    masks = np.zeros((9, H * W), np.float32)
    t = 0
    for kh in range(3):
        for kw in range(3):
            dh, dw = kh - 1, kw - 1
            valid = ((hh + dh >= 0) & (hh + dh < H)
                     & (ww + dw >= 0) & (ww + dw < W))
            masks[t] = valid.astype(np.float32)
            t += 1
    return jnp.asarray(masks)


def nl_basicblock(x_nchw, w1_oihw, w2_oihw, wg_oihw, wth_oihw, wph_oihw,
                  wW_oihw, prelu_a):
    """NLBasicBlock forward. Activations/weights in PyTorch NCHW / OIHW."""
    N, C, H, W = x_nchw.shape
    assert w1_oihw.shape[0] == C, "NLBasicBlock requires planes == inplanes"
    Ci = wg_oihw.shape[0]
    assert Ci == C, "NLBasicBlock uses inter_channels == inplanes"
    HW = H * W

    def fold3x3(w):      # OIHW -> (O, 9*I), column order (kh, kw, ci)
        o, i, kh, kw = w.shape
        return jnp.transpose(w, (0, 2, 3, 1)).reshape(o, kh * kw * i)

    x_flat = x_nchw.reshape(N, C, HW)
    w1_2d = fold3x3(w1_oihw)
    w2_2d = fold3x3(w2_oihw)
    wg2 = wg_oihw.reshape(Ci, C)
    wth2 = wth_oihw.reshape(Ci, C)
    wph2 = wph_oihw.reshape(Ci, C)
    ww2 = wW_oihw.reshape(C, Ci)
    masks = _tap_masks(H, W)

    kernel = _make_kernel(H, W, C)
    out_flat = pl.pallas_call(
        kernel,
        out_shape=jax.ShapeDtypeStruct((N, C, HW), x_nchw.dtype),
        grid=(N,),
        in_specs=[
            pl.BlockSpec((1, C, HW), lambda n: (n, 0, 0)),       # x (per image)
            pl.BlockSpec((C, 9 * C), lambda n: (0, 0)),          # conv1 folded w
            pl.BlockSpec((C, 9 * C), lambda n: (0, 0)),          # conv2 folded w
            pl.BlockSpec((Ci, C), lambda n: (0, 0)),             # NL g    (1x1)
            pl.BlockSpec((Ci, C), lambda n: (0, 0)),             # NL theta(1x1)
            pl.BlockSpec((Ci, C), lambda n: (0, 0)),             # NL phi  (1x1)
            pl.BlockSpec((C, Ci), lambda n: (0, 0)),             # NL W    (1x1)
            pl.BlockSpec((9, HW), lambda n: (0, 0)),             # conv tap masks
            pl.BlockSpec(memory_space=pltpu.MemorySpace.SMEM),   # PReLU slope
        ],
        out_specs=pl.BlockSpec((1, C, HW), lambda n: (n, 0, 0)),
        scratch_shapes=[pltpu.VMEM((9 * C, HW), jnp.float32)],   # folded-tap slab
        compiler_params=pltpu.CompilerParams(
            dimension_semantics=("parallel",),
            vmem_limit_bytes=32 * 1024 * 1024),
    )(x_flat, w1_2d, w2_2d, wg2, wth2, wph2, ww2, masks, prelu_a)
    return out_flat.reshape(N, C, H, W)


# ----------------------------- pure-JAX reference ----------------------------
def _prelu_ref(v, a):
    return jnp.where(v >= 0, v, a * v)


def reference_nchw(x, w1, w2, wg, wth, wph, wW, a):
    hi = lax.Precision.HIGHEST
    conv = lambda inp, w: lax.conv_general_dilated(
        inp, w, window_strides=(1, 1), padding="SAME",
        dimension_numbers=("NCHW", "OIHW", "NCHW"), precision=hi)
    B, C, H, W = x.shape
    Ci = wg.shape[0]
    y1 = conv(x, w1)                                   # conv1 (also residual)
    o = _prelu_ref(y1, a)
    # NonLocalBlock2D
    g_x = conv(o, wg).reshape(B, Ci, H * W).transpose(0, 2, 1)
    th_x = conv(o, wth).reshape(B, Ci, H * W).transpose(0, 2, 1)
    ph_x = conv(o, wph).reshape(B, Ci, H * W)
    f = jnp.einsum("bic,bcj->bij", th_x, ph_x, precision=hi)
    f_div = jax.nn.softmax(f, axis=1)                  # torch F.softmax(f, dim=1)
    y = jnp.einsum("bij,bjc->bic", f_div, g_x, precision=hi)
    y = y.transpose(0, 2, 1).reshape(B, Ci, H, W)
    z = conv(y, wW) + o
    out1 = z + y1
    y2 = conv(out1, w2)                                # BasicConv: conv only
    return _prelu_ref(y2, a)


if __name__ == "__main__":
    N, C, H, W = 2, 4, 16, 16           # inplanes = planes = inter_channels = 4

    key = jax.random.PRNGKey(0)
    ks = jax.random.split(key, 7)
    x = jax.random.normal(ks[0], (N, C, H, W), jnp.float32)
    w1 = jax.random.normal(ks[1], (C, C, 3, 3), jnp.float32) * 0.1   # conv1
    w2 = jax.random.normal(ks[2], (C, C, 3, 3), jnp.float32) * 0.1   # conv2
    wg = jax.random.normal(ks[3], (C, C, 1, 1), jnp.float32) * 0.1   # NL g
    wth = jax.random.normal(ks[4], (C, C, 1, 1), jnp.float32) * 0.1  # NL theta
    wph = jax.random.normal(ks[5], (C, C, 1, 1), jnp.float32) * 0.1  # NL phi
    # PyTorch initializes NL W to zero; random weights exercise the full path.
    wW = jax.random.normal(ks[6], (C, C, 1, 1), jnp.float32) * 0.1   # NL W
    prelu_a = jnp.array([0.25], jnp.float32)                         # nn.PReLU()

    out = nl_basicblock(x, w1, w2, wg, wth, wph, wW, prelu_a)
    out = jax.block_until_ready(out)

    ref = reference_nchw(x, w1, w2, wg, wth, wph, wW, prelu_a[0])
    assert out.shape == ref.shape
    max_err = float(jnp.max(jnp.abs(out - ref)))
    assert jnp.allclose(out, ref, atol=2e-2, rtol=2e-2), max_err
    print("KERNEL_OK")
</pallas_src>

<mosaic_0001>
module attributes {stable_mosaic.version = 11 : i64} {
  func.func @kernel(%arg0: i32, %arg1: memref<1x4x256xf32, #tpu.memory_space<vmem>>, %arg2: memref<4x36xf32, #tpu.memory_space<vmem>>, %arg3: memref<4x36xf32, #tpu.memory_space<vmem>>, %arg4: memref<4x4xf32, #tpu.memory_space<vmem>>, %arg5: memref<4x4xf32, #tpu.memory_space<vmem>>, %arg6: memref<4x4xf32, #tpu.memory_space<vmem>>, %arg7: memref<4x4xf32, #tpu.memory_space<vmem>>, %arg8: memref<9x256xf32, #tpu.memory_space<vmem>>, %arg9: memref<1xf32, #tpu.memory_space<smem>>, %arg10: memref<1x4x256xf32, #tpu.memory_space<vmem>>, %arg11: memref<36x256xf32, #tpu.memory_space<vmem>>) attributes {dimension_semantics = [#tpu.dimension_semantics<parallel>], iteration_bounds = array<i64: 2>, scalar_prefetch = 0 : i64, scratch_operands = 1 : i64, tpu.core_type = #tpu.core_type<tc>, window_params = [{transform_indices = @transform_0, window_bounds = array<i64: 1, 4, 256>}, {pipeline_mode = #tpu.pipeline_mode<synchronous>, transform_indices = @transform_1, window_bounds = array<i64: 4, 36>}, {pipeline_mode = #tpu.pipeline_mode<synchronous>, transform_indices = @transform_2, window_bounds = array<i64: 4, 36>}, {pipeline_mode = #tpu.pipeline_mode<synchronous>, transform_indices = @transform_3, window_bounds = array<i64: 4, 4>}, {pipeline_mode = #tpu.pipeline_mode<synchronous>, transform_indices = @transform_4, window_bounds = array<i64: 4, 4>}, {pipeline_mode = #tpu.pipeline_mode<synchronous>, transform_indices = @transform_5, window_bounds = array<i64: 4, 4>}, {pipeline_mode = #tpu.pipeline_mode<synchronous>, transform_indices = @transform_6, window_bounds = array<i64: 4, 4>}, {pipeline_mode = #tpu.pipeline_mode<synchronous>, transform_indices = @transform_7, window_bounds = array<i64: 9, 256>}, {transform_indices = @transform_8, window_bounds = array<i64: 1>}, {transform_indices = @transform_9, window_bounds = array<i64: 1, 4, 256>}]} {
    %c0 = arith.constant 0 : index
    %0 = memref.load %arg9[%c0] : memref<1xf32, #tpu.memory_space<smem>>
    %c0_0 = arith.constant 0 : index
    %c0_1 = arith.constant 0 : index
    %c0_2 = arith.constant 0 : index
    %1 = vector.load %arg1[%c0_0, %c0_1, %c0_2] : memref<1x4x256xf32, #tpu.memory_space<vmem>>, vector<1x4x256xf32>
    %2 = vector.shape_cast %1 : vector<1x4x256xf32> to vector<4x256xf32>
    %c0_3 = arith.constant 0 : index
    %c0_4 = arith.constant 0 : index
    %3 = vector.load %arg2[%c0_3, %c0_4] : memref<4x36xf32, #tpu.memory_space<vmem>>, vector<4x36xf32>
    %4 = vector.extract_strided_slice %2 {offsets = [0, 239], sizes = [4, 17], strides = [1, 1]} : vector<4x256xf32> to vector<4x17xf32>
    %5 = vector.extract_strided_slice %2 {offsets = [0, 0], sizes = [4, 239], strides = [1, 1]} : vector<4x256xf32> to vector<4x239xf32>
    %6 = tpu.concatenate %4, %5 in 1 : vector<4x17xf32>, vector<4x239xf32> -> vector<4x256xf32>
    %c0_5 = arith.constant 0 : index
    %c0_6 = arith.constant 0 : index
    %7 = vector.load %arg8[%c0_5, %c0_6] : memref<9x256xf32, #tpu.memory_space<vmem>>, vector<1x256xf32>
    %8 = vector.broadcast %7 : vector<1x256xf32> to vector<4x256xf32>
    %9 = arith.mulf %6, %8 : vector<4x256xf32>
    %c0_7 = arith.constant 0 : index
    %c0_8 = arith.constant 0 : index
    %10 = vector.load %arg11[%c0_7, %c0_8] : memref<36x256xf32, #tpu.memory_space<vmem>>, vector<4x256xf32>
    tpu.vector_store %arg11[%c0_7, %c0_8], %9 {strides = array<i32>} : memref<36x256xf32, #tpu.memory_space<vmem>>, vector<4x256xf32>,
    %11 = vector.extract_strided_slice %2 {offsets = [0, 240], sizes = [4, 16], strides = [1, 1]} : vector<4x256xf32> to vector<4x16xf32>
    %12 = vector.extract_strided_slice %2 {offsets = [0, 0], sizes = [4, 240], strides = [1, 1]} : vector<4x256xf32> to vector<4x240xf32>
    %13 = tpu.concatenate %11, %12 in 1 : vector<4x16xf32>, vector<4x240xf32> -> vector<4x256xf32>
    %c1 = arith.constant 1 : index
    %c0_9 = arith.constant 0 : index
    %14 = vector.load %arg8[%c1, %c0_9] : memref<9x256xf32, #tpu.memory_space<vmem>>, vector<1x256xf32>
    %15 = vector.broadcast %14 : vector<1x256xf32> to vector<4x256xf32>
    %16 = arith.mulf %13, %15 : vector<4x256xf32>
    %c4 = arith.constant 4 : index
    %c0_10 = arith.constant 0 : index
    %17 = vector.load %arg11[%c4, %c0_10] : memref<36x256xf32, #tpu.memory_space<vmem>>, vector<4x256xf32>
    tpu.vector_store %arg11[%c4, %c0_10], %16 {strides = array<i32>} : memref<36x256xf32, #tpu.memory_space<vmem>>, vector<4x256xf32>,
    %18 = vector.extract_strided_slice %2 {offsets = [0, 241], sizes = [4, 15], strides = [1, 1]} : vector<4x256xf32> to vector<4x15xf32>
    %19 = vector.extract_strided_slice %2 {offsets = [0, 0], sizes = [4, 241], strides = [1, 1]} : vector<4x256xf32> to vector<4x241xf32>
    %20 = tpu.concatenate %18, %19 in 1 : vector<4x15xf32>, vector<4x241xf32> -> vector<4x256xf32>
    %c2 = arith.constant 2 : index
    %c0_11 = arith.constant 0 : index
    %21 = vector.load %arg8[%c2, %c0_11] : memref<9x256xf32, #tpu.memory_space<vmem>>, vector<1x256xf32>
    %22 = vector.broadcast %21 : vector<1x256xf32> to vector<4x256xf32>
    %23 = arith.mulf %20, %22 : vector<4x256xf32>
    %c8 = arith.constant 8 : index
    %c0_12 = arith.constant 0 : index
    %24 = vector.load %arg11[%c8, %c0_12] : memref<36x256xf32, #tpu.memory_space<vmem>>, vector<4x256xf32>
    tpu.vector_store %arg11[%c8, %c0_12], %23 {strides = array<i32>} : memref<36x256xf32, #tpu.memory_space<vmem>>, vector<4x256xf32>,
    %25 = vector.extract_strided_slice %2 {offsets = [0, 255], sizes = [4, 1], strides = [1, 1]} : vector<4x256xf32> to vector<4x1xf32>
    %26 = vector.extract_strided_slice %2 {offsets = [0, 0], sizes = [4, 255], strides = [1, 1]} : vector<4x256xf32> to vector<4x255xf32>
    %27 = tpu.concatenate %25, %26 in 1 : vector<4x1xf32>, vector<4x255xf32> -> vector<4x256xf32>
    %c3 = arith.constant 3 : index
    %c0_13 = arith.constant 0 : index
    %28 = vector.load %arg8[%c3, %c0_13] : memref<9x256xf32, #tpu.memory_space<vmem>>, vector<1x256xf32>
    %29 = vector.broadcast %28 : vector<1x256xf32> to vector<4x256xf32>
    %30 = arith.mulf %27, %29 : vector<4x256xf32>
    %c12 = arith.constant 12 : index
    %c0_14 = arith.constant 0 : index
    %31 = vector.load %arg11[%c12, %c0_14] : memref<36x256xf32, #tpu.memory_space<vmem>>, vector<4x256xf32>
    tpu.vector_store %arg11[%c12, %c0_14], %30 {strides = array<i32>} : memref<36x256xf32, #tpu.memory_space<vmem>>, vector<4x256xf32>,
    %c4_15 = arith.constant 4 : index
    %c0_16 = arith.constant 0 : index
    %32 = vector.load %arg8[%c4_15, %c0_16] : memref<9x256xf32, #tpu.memory_space<vmem>>, vector<1x256xf32>
    %33 = vector.broadcast %32 : vector<1x256xf32> to vector<4x256xf32>
    %34 = arith.mulf %2, %33 : vector<4x256xf32>
    %c16 = arith.constant 16 : index
    %c0_17 = arith.constant 0 : index
    %35 = vector.load %arg11[%c16, %c0_17] : memref<36x256xf32, #tpu.memory_space<vmem>>, vector<4x256xf32>
    tpu.vector_store %arg11[%c16, %c0_17], %34 {strides = array<i32>} : memref<36x256xf32, #tpu.memory_space<vmem>>, vector<4x256xf32>,
    %36 = vector.extract_strided_slice %2 {offsets = [0, 1], sizes = [4, 255], strides = [1, 1]} : vector<4x256xf32> to vector<4x255xf32>
    %37 = vector.extract_strided_slice %2 {offsets = [0, 0], sizes = [4, 1], strides = [1, 1]} : vector<4x256xf32> to vector<4x1xf32>
    %38 = tpu.concatenate %36, %37 in 1 : vector<4x255xf32>, vector<4x1xf32> -> vector<4x256xf32>
    %c5 = arith.constant 5 : index
    %c0_18 = arith.constant 0 : index
    %39 = vector.load %arg8[%c5, %c0_18] : memref<9x256xf32, #tpu.memory_space<vmem>>, vector<1x256xf32>
    %40 = vector.broadcast %39 : vector<1x256xf32> to vector<4x256xf32>
    %41 = arith.mulf %38, %40 : vector<4x256xf32>
    %c20 = arith.constant 20 : index
    %c0_19 = arith.constant 0 : index
    %42 = vector.load %arg11[%c20, %c0_19] : memref<36x256xf32, #tpu.memory_space<vmem>>, vector<4x256xf32>
    tpu.vector_store %arg11[%c20, %c0_19], %41 {strides = array<i32>} : memref<36x256xf32, #tpu.memory_space<vmem>>, vector<4x256xf32>,
    %43 = vector.extract_strided_slice %2 {offsets = [0, 15], sizes = [4, 241], strides = [1, 1]} : vector<4x256xf32> to vector<4x241xf32>
    %44 = vector.extract_strided_slice %2 {offsets = [0, 0], sizes = [4, 15], strides = [1, 1]} : vector<4x256xf32> to vector<4x15xf32>
    %45 = tpu.concatenate %43, %44 in 1 : vector<4x241xf32>, vector<4x15xf32> -> vector<4x256xf32>
    %c6 = arith.constant 6 : index
    %c0_20 = arith.constant 0 : index
    %46 = vector.load %arg8[%c6, %c0_20] : memref<9x256xf32, #tpu.memory_space<vmem>>, vector<1x256xf32>
    %47 = vector.broadcast %46 : vector<1x256xf32> to vector<4x256xf32>
    %48 = arith.mulf %45, %47 : vector<4x256xf32>
    %c24 = arith.constant 24 : index
    %c0_21 = arith.constant 0 : index
    %49 = vector.load %arg11[%c24, %c0_21] : memref<36x256xf32, #tpu.memory_space<vmem>>, vector<4x256xf32>
    tpu.vector_store %arg11[%c24, %c0_21], %48 {strides = array<i32>} : memref<36x256xf32, #tpu.memory_space<vmem>>, vector<4x256xf32>,
    %50 = vector.extract_strided_slice %2 {offsets = [0, 16], sizes = [4, 240], strides = [1, 1]} : vector<4x256xf32> to vector<4x240xf32>
    %51 = vector.extract_strided_slice %2 {offsets = [0, 0], sizes = [4, 16], strides = [1, 1]} : vector<4x256xf32> to vector<4x16xf32>
    %52 = tpu.concatenate %50, %51 in 1 : vector<4x240xf32>, vector<4x16xf32> -> vector<4x256xf32>
    %c7 = arith.constant 7 : index
    %c0_22 = arith.constant 0 : index
    %53 = vector.load %arg8[%c7, %c0_22] : memref<9x256xf32, #tpu.memory_space<vmem>>, vector<1x256xf32>
    %54 = vector.broadcast %53 : vector<1x256xf32> to vector<4x256xf32>
    %55 = arith.mulf %52, %54 : vector<4x256xf32>
    %c28 = arith.constant 28 : index
    %c0_23 = arith.constant 0 : index
    %56 = vector.load %arg11[%c28, %c0_23] : memref<36x256xf32, #tpu.memory_space<vmem>>, vector<4x256xf32>
    tpu.vector_store %arg11[%c28, %c0_23], %55 {strides = array<i32>} : memref<36x256xf32, #tpu.memory_space<vmem>>, vector<4x256xf32>,
    %57 = vector.extract_strided_slice %2 {offsets = [0, 17], sizes = [4, 239], strides = [1, 1]} : vector<4x256xf32> to vector<4x239xf32>
    %58 = vector.extract_strided_slice %2 {offsets = [0, 0], sizes = [4, 17], strides = [1, 1]} : vector<4x256xf32> to vector<4x17xf32>
    %59 = tpu.concatenate %57, %58 in 1 : vector<4x239xf32>, vector<4x17xf32> -> vector<4x256xf32>
    %c8_24 = arith.constant 8 : index
    %c0_25 = arith.constant 0 : index
    %60 = vector.load %arg8[%c8_24, %c0_25] : memref<9x256xf32, #tpu.memory_space<vmem>>, vector<1x256xf32>
    %61 = vector.broadcast %60 : vector<1x256xf32> to vector<4x256xf32>
    %62 = arith.mulf %59, %61 : vector<4x256xf32>
    %c32 = arith.constant 32 : index
    %c0_26 = arith.constant 0 : index
    %63 = vector.load %arg11[%c32, %c0_26] : memref<36x256xf32, #tpu.memory_space<vmem>>, vector<4x256xf32>
    tpu.vector_store %arg11[%c32, %c0_26], %62 {strides = array<i32>} : memref<36x256xf32, #tpu.memory_space<vmem>>, vector<4x256xf32>,
    %c0_27 = arith.constant 0 : index
    %c0_28 = arith.constant 0 : index
    %64 = vector.load %arg11[%c0_27, %c0_28] : memref<36x256xf32, #tpu.memory_space<vmem>>, vector<36x256xf32>
    %cst = arith.constant dense<0.000000e+00> : vector<4x256xf32>
    %65 = tpu.matmul %3, %64, %cst {dimension_numbers = #tpu.dot_dimension_numbers<[1], [0], [0], [1], [0, 0, 1, 1], [], []>} : vector<4x36xf32>, vector<36x256xf32>, vector<4x256xf32> -> vector<4x256xf32>
    %cst_29 = arith.constant 0.000000e+00 : f32
    %66 = vector.broadcast %cst_29 : f32 to vector<4x256xf32>
    %67 = arith.cmpf oge, %65, %66 : vector<4x256xf32>
    %68 = vector.broadcast %0 : f32 to vector<4x256xf32>
    %69 = arith.mulf %68, %65 : vector<4x256xf32>
    %70 = arith.select %67, %65, %69 : vector<4x256xi1>, vector<4x256xf32>
    %c0_30 = arith.constant 0 : index
    %c0_31 = arith.constant 0 : index
    %71 = vector.load %arg5[%c0_30, %c0_31] : memref<4x4xf32, #tpu.memory_space<vmem>>, vector<4x4xf32>
    %cst_32 = arith.constant dense<0.000000e+00> : vector<4x256xf32>
    %72 = tpu.matmul %71, %70, %cst_32 {dimension_numbers = #tpu.dot_dimension_numbers<[1], [0], [0], [1], [0, 0, 1, 1], [], []>} : vector<4x4xf32>, vector<4x256xf32>, vector<4x256xf32> -> vector<4x256xf32>
    %c0_33 = arith.constant 0 : index
    %c0_34 = arith.constant 0 : index
    %73 = vector.load %arg6[%c0_33, %c0_34] : memref<4x4xf32, #tpu.memory_space<vmem>>, vector<4x4xf32>
    %cst_35 = arith.constant dense<0.000000e+00> : vector<4x256xf32>
    %74 = tpu.matmul %73, %70, %cst_35 {dimension_numbers = #tpu.dot_dimension_numbers<[1], [0], [0], [1], [0, 0, 1, 1], [], []>} : vector<4x4xf32>, vector<4x256xf32>, vector<4x256xf32> -> vector<4x256xf32>
    %c0_36 = arith.constant 0 : index
    %c0_37 = arith.constant 0 : index
    %75 = vector.load %arg4[%c0_36, %c0_37] : memref<4x4xf32, #tpu.memory_space<vmem>>, vector<4x4xf32>
    %cst_38 = arith.constant dense<0.000000e+00> : vector<4x256xf32>
    %76 = tpu.matmul %75, %70, %cst_38 {dimension_numbers = #tpu.dot_dimension_numbers<[1], [0], [0], [1], [0, 0, 1, 1], [], []>} : vector<4x4xf32>, vector<4x256xf32>, vector<4x256xf32> -> vector<4x256xf32>
    %cst_39 = arith.constant dense<0.000000e+00> : vector<256x256xf32>
    %77 = tpu.matmul %74, %72, %cst_39 {dimension_numbers = #tpu.dot_dimension_numbers<[0], [0], [1], [1], [0, 1, 1, 1], [], []>} : vector<4x256xf32>, vector<4x256xf32>, vector<256x256xf32> -> vector<256x256xf32>
    %cst_40 = arith.constant dense<0xFF800000> : vector<256xf32>
    %78 = vector.multi_reduction <maximumf>, %77, %cst_40 [1] : vector<256x256xf32> to vector<256xf32>
    %79 = vector.shape_cast %78 : vector<256xf32> to vector<256x1xf32>
    %80 = vector.broadcast %79 : vector<256x1xf32> to vector<256x256xf32>
    %81 = arith.subf %77, %80 : vector<256x256xf32>
    %82 = math.exp %81 : vector<256x256xf32>
    %cst_41 = arith.constant dense<0.000000e+00> : vector<256xf32>
    %83 = vector.multi_reduction <add>, %82, %cst_41 [1] : vector<256x256xf32> to vector<256xf32>
    %84 = vector.shape_cast %83 : vector<256xf32> to vector<256x1xf32>
    %85 = vector.broadcast %84 : vector<256x1xf32> to vector<256x256xf32>
    %86 = arith.divf %82, %85 : vector<256x256xf32>
    %cst_42 = arith.constant dense<0.000000e+00> : vector<4x256xf32>
    %87 = tpu.matmul %76, %86, %cst_42 {dimension_numbers = #tpu.dot_dimension_numbers<[1], [0], [0], [1], [0, 0, 1, 1], [], []>} : vector<4x256xf32>, vector<256x256xf32>, vector<4x256xf32> -> vector<4x256xf32>
    %c0_43 = arith.constant 0 : index
    %c0_44 = arith.constant 0 : index
    %88 = vector.load %arg7[%c0_43, %c0_44] : memref<4x4xf32, #tpu.memory_space<vmem>>, vector<4x4xf32>
    %cst_45 = arith.constant dense<0.000000e+00> : vector<4x256xf32>
    %89 = tpu.matmul %88, %87, %cst_45 {dimension_numbers = #tpu.dot_dimension_numbers<[1], [0], [0], [1], [0, 0, 1, 1], [], []>} : vector<4x4xf32>, vector<4x256xf32>, vector<4x256xf32> -> vector<4x256xf32>
    %90 = arith.addf %89, %70 : vector<4x256xf32>
    %91 = arith.addf %90, %65 : vector<4x256xf32>
    %c0_46 = arith.constant 0 : index
    %c0_47 = arith.constant 0 : index
    %92 = vector.load %arg3[%c0_46, %c0_47] : memref<4x36xf32, #tpu.memory_space<vmem>>, vector<4x36xf32>
    %93 = vector.extract_strided_slice %91 {offsets = [0, 239], sizes = [4, 17], strides = [1, 1]} : vector<4x256xf32> to vector<4x17xf32>
    %94 = vector.extract_strided_slice %91 {offsets = [0, 0], sizes = [4, 239], strides = [1, 1]} : vector<4x256xf32> to vector<4x239xf32>
    %95 = tpu.concatenate %93, %94 in 1 : vector<4x17xf32>, vector<4x239xf32> -> vector<4x256xf32>
    %c0_48 = arith.constant 0 : index
    %c0_49 = arith.constant 0 : index
    %96 = vector.load %arg8[%c0_48, %c0_49] : memref<9x256xf32, #tpu.memory_space<vmem>>, vector<1x256xf32>
    %97 = vector.broadcast %96 : vector<1x256xf32> to vector<4x256xf32>
    %98 = arith.mulf %95, %97 : vector<4x256xf32>
    %c0_50 = arith.constant 0 : index
    %c0_51 = arith.constant 0 : index
    %99 = vector.load %arg11[%c0_50, %c0_51] : memref<36x256xf32, #tpu.memory_space<vmem>>, vector<4x256xf32>
    tpu.vector_store %arg11[%c0_50, %c0_51], %98 {strides = array<i32>} : memref<36x256xf32, #tpu.memory_space<vmem>>, vector<4x256xf32>,
    %100 = vector.extract_strided_slice %91 {offsets = [0, 240], sizes = [4, 16], strides = [1, 1]} : vector<4x256xf32> to vector<4x16xf32>
    %101 = vector.extract_strided_slice %91 {offsets = [0, 0], sizes = [4, 240], strides = [1, 1]} : vector<4x256xf32> to vector<4x240xf32>
    %102 = tpu.concatenate %100, %101 in 1 : vector<4x16xf32>, vector<4x240xf32> -> vector<4x256xf32>
    %c1_52 = arith.constant 1 : index
    %c0_53 = arith.constant 0 : index
    %103 = vector.load %arg8[%c1_52, %c0_53] : memref<9x256xf32, #tpu.memory_space<vmem>>, vector<1x256xf32>
    %104 = vector.broadcast %103 : vector<1x256xf32> to vector<4x256xf32>
    %105 = arith.mulf %102, %104 : vector<4x256xf32>
    %c4_54 = arith.constant 4 : index
    %c0_55 = arith.constant 0 : index
    %106 = vector.load %arg11[%c4_54, %c0_55] : memref<36x256xf32, #tpu.memory_space<vmem>>, vector<4x256xf32>
    tpu.vector_store %arg11[%c4_54, %c0_55], %105 {strides = array<i32>} : memref<36x256xf32, #tpu.memory_space<vmem>>, vector<4x256xf32>,
    %107 = vector.extract_strided_slice %91 {offsets = [0, 241], sizes = [4, 15], strides = [1, 1]} : vector<4x256xf32> to vector<4x15xf32>
    %108 = vector.extract_strided_slice %91 {offsets = [0, 0], sizes = [4, 241], strides = [1, 1]} : vector<4x256xf32> to vector<4x241xf32>
    %109 = tpu.concatenate %107, %108 in 1 : vector<4x15xf32>, vector<4x241xf32> -> vector<4x256xf32>
    %c2_56 = arith.constant 2 : index
    %c0_57 = arith.constant 0 : index
    %110 = vector.load %arg8[%c2_56, %c0_57] : memref<9x256xf32, #tpu.memory_space<vmem>>, vector<1x256xf32>
    %111 = vector.broadcast %110 : vector<1x256xf32> to vector<4x256xf32>
    %112 = arith.mulf %109, %111 : vector<4x256xf32>
    %c8_58 = arith.constant 8 : index
    %c0_59 = arith.constant 0 : index
    %113 = vector.load %arg11[%c8_58, %c0_59] : memref<36x256xf32, #tpu.memory_space<vmem>>, vector<4x256xf32>
    tpu.vector_store %arg11[%c8_58, %c0_59], %112 {strides = array<i32>} : memref<36x256xf32, #tpu.memory_space<vmem>>, vector<4x256xf32>,
    %114 = vector.extract_strided_slice %91 {offsets = [0, 255], sizes = [4, 1], strides = [1, 1]} : vector<4x256xf32> to vector<4x1xf32>
    %115 = vector.extract_strided_slice %91 {offsets = [0, 0], sizes = [4, 255], strides = [1, 1]} : vector<4x256xf32> to vector<4x255xf32>
    %116 = tpu.concatenate %114, %115 in 1 : vector<4x1xf32>, vector<4x255xf32> -> vector<4x256xf32>
    %c3_60 = arith.constant 3 : index
    %c0_61 = arith.constant 0 : index
    %117 = vector.load %arg8[%c3_60, %c0_61] : memref<9x256xf32, #tpu.memory_space<vmem>>, vector<1x256xf32>
    %118 = vector.broadcast %117 : vector<1x256xf32> to vector<4x256xf32>
    %119 = arith.mulf %116, %118 : vector<4x256xf32>
    %c12_62 = arith.constant 12 : index
    %c0_63 = arith.constant 0 : index
    %120 = vector.load %arg11[%c12_62, %c0_63] : memref<36x256xf32, #tpu.memory_space<vmem>>, vector<4x256xf32>
    tpu.vector_store %arg11[%c12_62, %c0_63], %119 {strides = array<i32>} : memref<36x256xf32, #tpu.memory_space<vmem>>, vector<4x256xf32>,
    %c4_64 = arith.constant 4 : index
    %c0_65 = arith.constant 0 : index
    %121 = vector.load %arg8[%c4_64, %c0_65] : memref<9x256xf32, #tpu.memory_space<vmem>>, vector<1x256xf32>
    %122 = vector.broadcast %121 : vector<1x256xf32> to vector<4x256xf32>
    %123 = arith.mulf %91, %122 : vector<4x256xf32>
    %c16_66 = arith.constant 16 : index
    %c0_67 = arith.constant 0 : index
    %124 = vector.load %arg11[%c16_66, %c0_67] : memref<36x256xf32, #tpu.memory_space<vmem>>, vector<4x256xf32>
    tpu.vector_store %arg11[%c16_66, %c0_67], %123 {strides = array<i32>} : memref<36x256xf32, #tpu.memory_space<vmem>>, vector<4x256xf32>,
    %125 = vector.extract_strided_slice %91 {offsets = [0, 1], sizes = [4, 255], strides = [1, 1]} : vector<4x256xf32> to vector<4x255xf32>
    %126 = vector.extract_strided_slice %91 {offsets = [0, 0], sizes = [4, 1], strides = [1, 1]} : vector<4x256xf32> to vector<4x1xf32>
    %127 = tpu.concatenate %125, %126 in 1 : vector<4x255xf32>, vector<4x1xf32> -> vector<4x256xf32>
    %c5_68 = arith.constant 5 : index
    %c0_69 = arith.constant 0 : index
    %128 = vector.load %arg8[%c5_68, %c0_69] : memref<9x256xf32, #tpu.memory_space<vmem>>, vector<1x256xf32>
    %129 = vector.broadcast %128 : vector<1x256xf32> to vector<4x256xf32>
    %130 = arith.mulf %127, %129 : vector<4x256xf32>
    %c20_70 = arith.constant 20 : index
    %c0_71 = arith.constant 0 : index
    %131 = vector.load %arg11[%c20_70, %c0_71] : memref<36x256xf32, #tpu.memory_space<vmem>>, vector<4x256xf32>
    tpu.vector_store %arg11[%c20_70, %c0_71], %130 {strides = array<i32>} : memref<36x256xf32, #tpu.memory_space<vmem>>, vector<4x256xf32>,
    %132 = vector.extract_strided_slice %91 {offsets = [0, 15], sizes = [4, 241], strides = [1, 1]} : vector<4x256xf32> to vector<4x241xf32>
    %133 = vector.extract_strided_slice %91 {offsets = [0, 0], sizes = [4, 15], strides = [1, 1]} : vector<4x256xf32> to vector<4x15xf32>
    %134 = tpu.concatenate %132, %133 in 1 : vector<4x241xf32>, vector<4x15xf32> -> vector<4x256xf32>
    %c6_72 = arith.constant 6 : index
    %c0_73 = arith.constant 0 : index
    %135 = vector.load %arg8[%c6_72, %c0_73] : memref<9x256xf32, #tpu.memory_space<vmem>>, vector<1x256xf32>
    %136 = vector.broadcast %135 : vector<1x256xf32> to vector<4x256xf32>
    %137 = arith.mulf %134, %136 : vector<4x256xf32>
    %c24_74 = arith.constant 24 : index
    %c0_75 = arith.constant 0 : index
    %138 = vector.load %arg11[%c24_74, %c0_75] : memref<36x256xf32, #tpu.memory_space<vmem>>, vector<4x256xf32>
    tpu.vector_store %arg11[%c24_74, %c0_75], %137 {strides = array<i32>} : memref<36x256xf32, #tpu.memory_space<vmem>>, vector<4x256xf32>,
    %139 = vector.extract_strided_slice %91 {offsets = [0, 16], sizes = [4, 240], strides = [1, 1]} : vector<4x256xf32> to vector<4x240xf32>
    %140 = vector.extract_strided_slice %91 {offsets = [0, 0], sizes = [4, 16], strides = [1, 1]} : vector<4x256xf32> to vector<4x16xf32>
    %141 = tpu.concatenate %139, %140 in 1 : vector<4x240xf32>, vector<4x16xf32> -> vector<4x256xf32>
    %c7_76 = arith.constant 7 : index
    %c0_77 = arith.constant 0 : index
    %142 = vector.load %arg8[%c7_76, %c0_77] : memref<9x256xf32, #tpu.memory_space<vmem>>, vector<1x256xf32>
    %143 = vector.broadcast %142 : vector<1x256xf32> to vector<4x256xf32>
    %144 = arith.mulf %141, %143 : vector<4x256xf32>
    %c28_78 = arith.constant 28 : index
    %c0_79 = arith.constant 0 : index
    %145 = vector.load %arg11[%c28_78, %c0_79] : memref<36x256xf32, #tpu.memory_space<vmem>>, vector<4x256xf32>
    tpu.vector_store %arg11[%c28_78, %c0_79], %144 {strides = array<i32>} : memref<36x256xf32, #tpu.memory_space<vmem>>, vector<4x256xf32>,
    %146 = vector.extract_strided_slice %91 {offsets = [0, 17], sizes = [4, 239], strides = [1, 1]} : vector<4x256xf32> to vector<4x239xf32>
    %147 = vector.extract_strided_slice %91 {offsets = [0, 0], sizes = [4, 17], strides = [1, 1]} : vector<4x256xf32> to vector<4x17xf32>
    %148 = tpu.concatenate %146, %147 in 1 : vector<4x239xf32>, vector<4x17xf32> -> vector<4x256xf32>
    %c8_80 = arith.constant 8 : index
    %c0_81 = arith.constant 0 : index
    %149 = vector.load %arg8[%c8_80, %c0_81] : memref<9x256xf32, #tpu.memory_space<vmem>>, vector<1x256xf32>
    %150 = vector.broadcast %149 : vector<1x256xf32> to vector<4x256xf32>
    %151 = arith.mulf %148, %150 : vector<4x256xf32>
    %c32_82 = arith.constant 32 : index
    %c0_83 = arith.constant 0 : index
    %152 = vector.load %arg11[%c32_82, %c0_83] : memref<36x256xf32, #tpu.memory_space<vmem>>, vector<4x256xf32>
    tpu.vector_store %arg11[%c32_82, %c0_83], %151 {strides = array<i32>} : memref<36x256xf32, #tpu.memory_space<vmem>>, vector<4x256xf32>,
    %c0_84 = arith.constant 0 : index
    %c0_85 = arith.constant 0 : index
    %153 = vector.load %arg11[%c0_84, %c0_85] : memref<36x256xf32, #tpu.memory_space<vmem>>, vector<36x256xf32>
    %cst_86 = arith.constant dense<0.000000e+00> : vector<4x256xf32>
    %154 = tpu.matmul %92, %153, %cst_86 {dimension_numbers = #tpu.dot_dimension_numbers<[1], [0], [0], [1], [0, 0, 1, 1], [], []>} : vector<4x36xf32>, vector<36x256xf32>, vector<4x256xf32> -> vector<4x256xf32>
    %cst_87 = arith.constant 0.000000e+00 : f32
    %155 = vector.broadcast %cst_87 : f32 to vector<4x256xf32>
    %156 = arith.cmpf oge, %154, %155 : vector<4x256xf32>
    %157 = vector.broadcast %0 : f32 to vector<4x256xf32>
    %158 = arith.mulf %157, %154 : vector<4x256xf32>
    %159 = arith.select %156, %154, %158 : vector<4x256xi1>, vector<4x256xf32>
    %c0_88 = arith.constant 0 : index
    %c0_89 = arith.constant 0 : index
    %c0_90 = arith.constant 0 : index
    %160 = vector.load %arg10[%c0_88, %c0_89, %c0_90] : memref<1x4x256xf32, #tpu.memory_space<vmem>>, vector<1x4x256xf32>
    %161 = vector.shape_cast %160 : vector<1x4x256xf32> to vector<4x256xf32>
    %162 = vector.shape_cast %159 : vector<4x256xf32> to vector<1x4x256xf32>
    tpu.vector_store %arg10[%c0_88, %c0_89, %c0_90], %162 {strides = array<i32>} : memref<1x4x256xf32, #tpu.memory_space<vmem>>, vector<1x4x256xf32>,
    return
  }
  func.func @transform_0(%arg0: i32) -> (i32, i32, i32) {
    %c0_i32 = arith.constant 0 : i32
    %c0_i32_0 = arith.constant 0 : i32
    %c0_i32_1 = arith.constant 0 : i32
    return %arg0, %c0_i32, %c0_i32_0 : i32, i32, i32
  }
  func.func @transform_1(%arg0: i32) -> (i32, i32) {
    %c0_i32 = arith.constant 0 : i32
    %c0_i32_0 = arith.constant 0 : i32
    %c0_i32_1 = arith.constant 0 : i32
    return %c0_i32, %c0_i32_0 : i32, i32
  }
  func.func @transform_2(%arg0: i32) -> (i32, i32) {
    %c0_i32 = arith.constant 0 : i32
    %c0_i32_0 = arith.constant 0 : i32
    %c0_i32_1 = arith.constant 0 : i32
    return %c0_i32, %c0_i32_0 : i32, i32
  }
  func.func @transform_3(%arg0: i32) -> (i32, i32) {
    %c0_i32 = arith.constant 0 : i32
    %c0_i32_0 = arith.constant 0 : i32
    %c0_i32_1 = arith.constant 0 : i32
    return %c0_i32, %c0_i32_0 : i32, i32
  }
  func.func @transform_4(%arg0: i32) -> (i32, i32) {
    %c0_i32 = arith.constant 0 : i32
    %c0_i32_0 = arith.constant 0 : i32
    %c0_i32_1 = arith.constant 0 : i32
    return %c0_i32, %c0_i32_0 : i32, i32
  }
  func.func @transform_5(%arg0: i32) -> (i32, i32) {
    %c0_i32 = arith.constant 0 : i32
    %c0_i32_0 = arith.constant 0 : i32
    %c0_i32_1 = arith.constant 0 : i32
    return %c0_i32, %c0_i32_0 : i32, i32
  }
  func.func @transform_6(%arg0: i32) -> (i32, i32) {
    %c0_i32 = arith.constant 0 : i32
    %c0_i32_0 = arith.constant 0 : i32
    %c0_i32_1 = arith.constant 0 : i32
    return %c0_i32, %c0_i32_0 : i32, i32
  }
  func.func @transform_7(%arg0: i32) -> (i32, i32) {
    %c0_i32 = arith.constant 0 : i32
    %c0_i32_0 = arith.constant 0 : i32
    %c0_i32_1 = arith.constant 0 : i32
    return %c0_i32, %c0_i32_0 : i32, i32
  }
  func.func @transform_8(%arg0: i32) -> i32 {
    %c0_i32 = arith.constant 0 : i32
    %c0_i32_0 = arith.constant 0 : i32
    return %c0_i32 : i32
  }
  func.func @transform_9(%arg0: i32) -> (i32, i32, i32) {
    %c0_i32 = arith.constant 0 : i32
    %c0_i32_0 = arith.constant 0 : i32
    %c0_i32_1 = arith.constant 0 : i32
    return %arg0, %c0_i32, %c0_i32_0 : i32, i32, i32
  }
}

</mosaic_0001>

<llo_original>
// kernel: tpu_custom_call.1
$region0: #{tpu_custom_call.1}
  #allocation0 [shape = 'u32[]', space=smem, size = 0x4, offset = 0x4, fixed_abs, tag = 'smem constant byte address 0x4 - core index']
  #allocation1 [shape = 'u32[144,128]{1,0:T(1,128)}', space=vmem, size = 0x12000, scoped, tag = 'internal scratch']
  #allocation2 [shape = 'f32[36,256]{1,0:T(8,128)}', space=vmem, size = 0xa000, scoped, tag = 'scratch operand']
  #allocation3 [shape = 'f32[1]{0:T(128)S(6)}', space=smem, size = 0x200, scoped, tag = 'scoped memory for tpu_custom_call.1']
  %s0 = inlined_call_operand.hbm [shape: f32[2,4,256], index: 0, kind: input, shape index: {}]
  %s1 = inlined_call_operand.vmem [shape: f32[4,36], index: 1, kind: input, shape index: {}]
  %s2 = inlined_call_operand.vmem [shape: f32[4,36], index: 2, kind: input, shape index: {}]
  %s3 = inlined_call_operand.vmem [shape: f32[4,4], index: 3, kind: input, shape index: {}]
  %s4 = inlined_call_operand.vmem [shape: f32[4,4], index: 4, kind: input, shape index: {}]
  %s5 = inlined_call_operand.vmem [shape: f32[4,4], index: 5, kind: input, shape index: {}]
  %s6 = inlined_call_operand.vmem [shape: f32[4,4], index: 6, kind: input, shape index: {}]
  %s7 = inlined_call_operand.hbm [shape: f32[9,256], index: 7, kind: input, shape index: {}]
  %s8 = inlined_call_operand.<no memory space> [shape: f32[1], index: 8, kind: input, shape index: {}]
  %s9 = inlined_call_operand.hbm [shape: f32[2,4,256], index: 9, kind: output, shape index: {}]
  %s10 = sld [smem:[#allocation0]]
  $region77: #{tpu_custom_call.1} parent=0
    _
  %s12 = ssub.s32 1, %s10
  %s13 = scalar_select 0, %s12, %s10
  %14 = sst [smem:[#allocation3]] %s8
  $region1: #{tpu_custom_call.1} parent=0
    #allocation4 [shape = 'u8[8192]{0}', space=vmem, size = 0x2000, scoped, tag = 'input window, operand 0']
    #allocation5 [shape = 's32[2]{0}', space=sflag, size = 0x8, scoped, tag = 'scoped memory for tpu_custom_call.1']
    #allocation6 [shape = 's32[2]{0}', space=sflag, size = 0x8, scoped, tag = 'scoped memory for tpu_custom_call.1']
    #allocation7 [shape = 'u8[16384]{0}', space=vmem, size = 0x4000, scoped, tag = 'input window, operand 7, single buffered']
    #allocation8 [shape = 's32[1]{0}', space=sflag, size = 0x4, scoped, tag = 'scoped memory for tpu_custom_call.1']
    #allocation9 [shape = 'u8[8192]{0}', space=vmem, size = 0x2000, scoped, tag = 'output window, operand 0']
    %15 = vsyncpa [#allocation5], 0
    %s16 = scalar_lea.sflag [#allocation5], 1
    %17 = vsyncpa %s16, 0
    %18 = vsyncpa [#allocation8], 0
    %19 = vsyncpa [#allocation6], 0
    %s20 = scalar_lea.sflag [#allocation6], 1
    %21 = vsyncpa %s20, 0
    loop: start=0, step=1, limit=4
    $region2: #{tpu_custom_call.1} parent=1 // loop_pre_header
      _
    $region3: #{tpu_custom_call.1} parent=1 // loop_header
      %s23 = sphi 0, %s27
      %p24 = scmp.ge.s32.totalorder %s23, 4
      %s33 = sphi 0, %s35
      %s36 = sphi 0, %s33
      %s37 = sphi 0, %s36
      %s53 = sphi 0, %s37
      %s57 = sphi 0, %s57
      %s59 = sphi 0, %s57
      %s60 = sphi 0, %s59
      %s74 = sphi 0, %s60
      %s78 = sphi 0, %s78
      %s80 = sphi 0, %s78
      %s81 = sphi 0, %s80
      %s95 = sphi 0, %s81
      %s99 = sphi 0, %s99
      %s101 = sphi 0, %s99
      %s102 = sphi 0, %s101
      %s116 = sphi 0, %s102
      %s120 = sphi 0, %s120
      %s122 = sphi 0, %s120
      %s123 = sphi 0, %s122
      %s137 = sphi 0, %s123
      %s141 = sphi 0, %s141
      %s143 = sphi 0, %s141
      %s144 = sphi 0, %s143
      %s158 = sphi 0, %s144
      %s162 = sphi 0, %s162
      %s164 = sphi 0, %s162
      %s165 = sphi 0, %s164
      %s179 = sphi 0, %s165
      %s183 = sphi 0, %s183
      %s185 = sphi 0, %s183
      %s186 = sphi 0, %s185
      %s200 = sphi 0, %s186
      %s204 = sphi 0, %s204
      %s206 = sphi 0, %s204
      %s207 = sphi 0, %s206
      %s221 = sphi 0, %s207
      %s227 = sphi 0, %s229
      %s230 = sphi 0, %s227
      %s231 = sphi 0, %s230
      %s247 = sphi 0, %s231
    $region4: #{tpu_custom_call.1} parent=1 // loop_header_branch
      %26 = sbr.rel (%p24) target = $region8
    $region5: #{tpu_custom_call.1} parent=1 // loop_body
      %s28 = ssub.s32 %s23, 1
      %s29 = ssub.s32 %s23, 2
      %s30 = sadd.s32 %s23, 1
      %s31 = ssub.s32 %s23, %s30
      %p32 = scmp.eq.s32.totalorder %s31, 0
      %s34 = sadd.s32 %s33, 1
      %s35 = scalar_select %p32, %s33, %s34
      %p38 = pneg %p32
      %p39 = scmp.eq.s32.totalorder %s23, 1
      %p40 = por %p38, %p39
      %p41 = scmp.ne.s32.totalorder %s33, %s36
      %p42 = scmp.eq.s32.totalorder %s23, 0
      %p43 = por %p41, %p42
      %p44 = scmp.ne.s32.totalorder %s33, %s36
      %p45 = scmp.eq.s32.totalorder %s28, 1
      %p46 = por %p44, %p45
      %p47 = scmp.ne.s32.totalorder %s36, %s37
      %p48 = scmp.eq.s32.totalorder %s28, 0
      %p49 = por %p47, %p48
      %p50 = scmp.ne.s32.totalorder %s36, %s37
      %p51 = scmp.eq.s32.totalorder %s29, 1
      %p52 = por %p50, %p51
      %p54 = scmp.ne.s32.totalorder %s37, %s53
      %p55 = scmp.eq.s32.totalorder %s29, 0
      %p56 = por %p54, %p55
      %s58 = sadd.s32 %s57, 1
      %p61 = scmp.eq.s32.totalorder %s23, 1
      %p62 = scmp.ne.s32.totalorder %s57, %s59
      %p63 = scmp.eq.s32.totalorder %s23, 0
      %p64 = por %p62, %p63
      %p65 = scmp.ne.s32.totalorder %s57, %s59
      %p66 = scmp.eq.s32.totalorder %s28, 1
      %p67 = por %p65, %p66
      %p68 = scmp.ne.s32.totalorder %s59, %s60
      %p69 = scmp.eq.s32.totalorder %s28, 0
      %p70 = por %p68, %p69
      %p71 = scmp.ne.s32.totalorder %s59, %s60
      %p72 = scmp.eq.s32.totalorder %s29, 1
      %p73 = por %p71, %p72
      %p75 = scmp.ne.s32.totalorder %s60, %s74
      %p76 = scmp.eq.s32.totalorder %s29, 0
      %p77 = por %p75, %p76
      %s79 = sadd.s32 %s78, 1
      %p82 = scmp.eq.s32.totalorder %s23, 1
      %p83 = scmp.ne.s32.totalorder %s78, %s80
      %p84 = scmp.eq.s32.totalorder %s23, 0
      %p85 = por %p83, %p84
      %p86 = scmp.ne.s32.totalorder %s78, %s80
      %p87 = scmp.eq.s32.totalorder %s28, 1
      %p88 = por %p86, %p87
      %p89 = scmp.ne.s32.totalorder %s80, %s81
      %p90 = scmp.eq.s32.totalorder %s28, 0
      %p91 = por %p89, %p90
      %p92 = scmp.ne.s32.totalorder %s80, %s81
      %p93 = scmp.eq.s32.totalorder %s29, 1
      %p94 = por %p92, %p93
      %p96 = scmp.ne.s32.totalorder %s81, %s95
      %p97 = scmp.eq.s32.totalorder %s29, 0
      %p98 = por %p96, %p97
      %s100 = sadd.s32 %s99, 1
      %p103 = scmp.eq.s32.totalorder %s23, 1
      %p104 = scmp.ne.s32.totalorder %s99, %s101
      %p105 = scmp.eq.s32.totalorder %s23, 0
      %p106 = por %p104, %p105
      %p107 = scmp.ne.s32.totalorder %s99, %s101
      %p108 = scmp.eq.s32.totalorder %s28, 1
      %p109 = por %p107, %p108
      %p110 = scmp.ne.s32.totalorder %s101, %s102
      %p111 = scmp.eq.s32.totalorder %s28, 0
      %p112 = por %p110, %p111
      %p113 = scmp.ne.s32.totalorder %s101, %s102
      %p114 = scmp.eq.s32.totalorder %s29, 1
      %p115 = por %p113, %p114
      %p117 = scmp.ne.s32.totalorder %s102, %s116
      %p118 = scmp.eq.s32.totalorder %s29, 0
      %p119 = por %p117, %p118
      %s121 = sadd.s32 %s120, 1
      %p124 = scmp.eq.s32.totalorder %s23, 1
      %p125 = scmp.ne.s32.totalorder %s120, %s122
      %p126 = scmp.eq.s32.totalorder %s23, 0
      %p127 = por %p125, %p126
      %p128 = scmp.ne.s32.totalorder %s120, %s122
      %p129 = scmp.eq.s32.totalorder %s28, 1
      %p130 = por %p128, %p129
      %p131 = scmp.ne.s32.totalorder %s122, %s123
      %p132 = scmp.eq.s32.totalorder %s28, 0
      %p133 = por %p131, %p132
      %p134 = scmp.ne.s32.totalorder %s122, %s123
      %p135 = scmp.eq.s32.totalorder %s29, 1
      %p136 = por %p134, %p135
      %p138 = scmp.ne.s32.totalorder %s123, %s137
      %p139 = scmp.eq.s32.totalorder %s29, 0
      %p140 = por %p138, %p139
      %s142 = sadd.s32 %s141, 1
      %p145 = scmp.eq.s32.totalorder %s23, 1
      %p146 = scmp.ne.s32.totalorder %s141, %s143
      %p147 = scmp.eq.s32.totalorder %s23, 0
      %p148 = por %p146, %p147
      %p149 = scmp.ne.s32.totalorder %s141, %s143
      %p150 = scmp.eq.s32.totalorder %s28, 1
      %p151 = por %p149, %p150
      %p152 = scmp.ne.s32.totalorder %s143, %s144
      %p153 = scmp.eq.s32.totalorder %s28, 0
      %p154 = por %p152, %p153
      %p155 = scmp.ne.s32.totalorder %s143, %s144
      %p156 = scmp.eq.s32.totalorder %s29, 1
      %p157 = por %p155, %p156
      %p159 = scmp.ne.s32.totalorder %s144, %s158
      %p160 = scmp.eq.s32.totalorder %s29, 0
      %p161 = por %p159, %p160
      %s163 = sadd.s32 %s162, 1
      %p166 = scmp.eq.s32.totalorder %s23, 1
      %p167 = scmp.ne.s32.totalorder %s162, %s164
      %p168 = scmp.eq.s32.totalorder %s23, 0
      %p169 = por %p167, %p168
      %p170 = scmp.ne.s32.totalorder %s162, %s164
      %p171 = scmp.eq.s32.totalorder %s28, 1
      %p172 = por %p170, %p171
      %p173 = scmp.ne.s32.totalorder %s164, %s165
      %p174 = scmp.eq.s32.totalorder %s28, 0
      %p175 = por %p173, %p174
      %p176 = scmp.ne.s32.totalorder %s164, %s165
      %p177 = scmp.eq.s32.totalorder %s29, 1
      %p178 = por %p176, %p177
      %p180 = scmp.ne.s32.totalorder %s165, %s179
      %p181 = scmp.eq.s32.totalorder %s29, 0
      %p182 = por %p180, %p181
      %s184 = sadd.s32 %s183, 1
      %p187 = scmp.eq.s32.totalorder %s23, 1
      %p188 = scmp.ne.s32.totalorder %s183, %s185
      %p189 = scmp.eq.s32.totalorder %s23, 0
      %p190 = por %p188, %p189
      %p191 = scmp.ne.s32.totalorder %s183, %s185
      %p192 = scmp.eq.s32.totalorder %s28, 1
      %p193 = por %p191, %p192
      %p194 = scmp.ne.s32.totalorder %s185, %s186
      %p195 = scmp.eq.s32.totalorder %s28, 0
      %p196 = por %p194, %p195
      %p197 = scmp.ne.s32.totalorder %s185, %s186
      %p198 = scmp.eq.s32.totalorder %s29, 1
      %p199 = por %p197, %p198
      %p201 = scmp.ne.s32.totalorder %s186, %s200
      %p202 = scmp.eq.s32.totalorder %s29, 0
      %p203 = por %p201, %p202
      %s205 = sadd.s32 %s204, 1
      %p208 = scmp.eq.s32.totalorder %s23, 1
      %p209 = scmp.ne.s32.totalorder %s204, %s206
      %p210 = scmp.eq.s32.totalorder %s23, 0
      %p211 = por %p209, %p210
      %p212 = scmp.ne.s32.totalorder %s204, %s206
      %p213 = scmp.eq.s32.totalorder %s28, 1
      %p214 = por %p212, %p213
      %p215 = scmp.ne.s32.totalorder %s206, %s207
      %p216 = scmp.eq.s32.totalorder %s28, 0
      %p217 = por %p215, %p216
      %p218 = scmp.ne.s32.totalorder %s206, %s207
      %p219 = scmp.eq.s32.totalorder %s29, 1
      %p220 = por %p218, %p219
      %p222 = scmp.ne.s32.totalorder %s207, %s221
      %p223 = scmp.eq.s32.totalorder %s29, 0
      %p224 = por %p222, %p223
      %s225 = ssub.s32 %s23, %s30
      %p226 = scmp.eq.s32.totalorder %s225, 0
      %s228 = sadd.s32 %s227, 1
      %s229 = scalar_select %p226, %s227, %s228
      %p232 = pneg %p226
      %p233 = scmp.eq.s32.totalorder %s23, 1
      %p234 = por %p232, %p233
      %p235 = scmp.ne.s32.totalorder %s227, %s230
      %p236 = scmp.eq.s32.totalorder %s23, 0
      %p237 = por %p235, %p236
      %p238 = scmp.ne.s32.totalorder %s227, %s230
      %p239 = scmp.eq.s32.totalorder %s28, 1
      %p240 = por %p238, %p239
      %p241 = scmp.ne.s32.totalorder %s230, %s231
      %p242 = scmp.eq.s32.totalorder %s28, 0
      %p243 = por %p241, %p242
      %p244 = scmp.ne.s32.totalorder %s230, %s231
      %p245 = scmp.eq.s32.totalorder %s29, 1
      %p246 = por %p244, %p245
      %p248 = scmp.ne.s32.totalorder %s231, %s247
      %p249 = scmp.eq.s32.totalorder %s29, 0
      %p250 = por %p248, %p249
      %p251 = scmp.le.s32.totalorder 1, %s23
      %p252 = scmp.lt.s32.totalorder %s23, 3
      %p253 = pnand %p251, %p252
      %p254 = pneg %p253
      // Predicated region
      $region9: #{tpu_custom_call.1} parent=5 // pred_check
        _
      $region10: #{tpu_custom_call.1} parent=5 // pred_check_branch
        %256 = sbr.rel (%p253) target = $region12
      $region11: #{tpu_custom_call.1} parent=5 // pred_region
        %s257 = ssub.s32 %s23, 1
        // Predicated region
        $region13: #{tpu_custom_call.1} parent=11 // pred_check
          %p258 = pneg %p70
        $region14: #{tpu_custom_call.1} parent=11 // pred_check_branch
          %260 = sbr.rel (%p258) target = $region16
        $region15: #{tpu_custom_call.1} parent=11 // pred_region
          _
        $region16: #{tpu_custom_call.1} parent=11 // pred_fallthru
          _
        // Predicated region
        $region17: #{tpu_custom_call.1} parent=11 // pred_check
          %p261 = pneg %p91
        $region18: #{tpu_custom_call.1} parent=11 // pred_check_branch
          %263 = sbr.rel (%p261) target = $region20
        $region19: #{tpu_custom_call.1} parent=11 // pred_region
          _
        $region20: #{tpu_custom_call.1} parent=11 // pred_fallthru
          _
        // Predicated region
        $region21: #{tpu_custom_call.1} parent=11 // pred_check
          %p264 = pneg %p112
        $region22: #{tpu_custom_call.1} parent=11 // pred_check_branch
          %266 = sbr.rel (%p264) target = $region24
        $region23: #{tpu_custom_call.1} parent=11 // pred_region
          _
        $region24: #{tpu_custom_call.1} parent=11 // pred_fallthru
          _
        // Predicated region
        $region25: #{tpu_custom_call.1} parent=11 // pred_check
          %p267 = pneg %p133
        $region26: #{tpu_custom_call.1} parent=11 // pred_check_branch
          %269 = sbr.rel (%p267) target = $region28
        $region27: #{tpu_custom_call.1} parent=11 // pred_region
          _
        $region28: #{tpu_custom_call.1} parent=11 // pred_fallthru
          _
        // Predicated region
        $region29: #{tpu_custom_call.1} parent=11 // pred_check
          %p270 = pneg %p154
        $region30: #{tpu_custom_call.1} parent=11 // pred_check_branch
          %272 = sbr.rel (%p270) target = $region32
        $region31: #{tpu_custom_call.1} parent=11 // pred_region
          _
        $region32: #{tpu_custom_call.1} parent=11 // pred_fallthru
          _
        // Predicated region
        $region33: #{tpu_custom_call.1} parent=11 // pred_check
          %p273 = pneg %p175
        $region34: #{tpu_custom_call.1} parent=11 // pred_check_branch
          %275 = sbr.rel (%p273) target = $region36
        $region35: #{tpu_custom_call.1} parent=11 // pred_region
          _
        $region36: #{tpu_custom_call.1} parent=11 // pred_fallthru
          _
        // Predicated region
        $region37: #{tpu_custom_call.1} parent=11 // pred_check
          %p276 = pneg %p196
        $region38: #{tpu_custom_call.1} parent=11 // pred_check_branch
          %278 = sbr.rel (%p276) target = $region40
        $region39: #{tpu_custom_call.1} parent=11 // pred_region
          %s280 = ssub.s32 512, 512
          %281 = vsyncadd [#allocation8], %s280
          %s282 = sshll.u32 [#allocation7], 4
          %s283 = int_to_ptr.vmem [resolvable:$true] %s282
          %288 = dma.hbm_to_vmem [thread:$0]  %s7, 512, %s283, [#allocation8], 256, 256, 16
        $region40: #{tpu_custom_call.1} parent=11 // pred_fallthru
          _
        // Predicated region
        $region41: #{tpu_custom_call.1} parent=11 // pred_check
          %p289 = pneg %p217
        $region42: #{tpu_custom_call.1} parent=11 // pred_check_branch
          %291 = sbr.rel (%p289) target = $region44
        $region43: #{tpu_custom_call.1} parent=11 // pred_region
          _
        $region44: #{tpu_custom_call.1} parent=11 // pred_fallthru
          _
      $region12: #{tpu_custom_call.1} parent=5 // pred_fallthru
        _
      %p292 = scmp.lt.s32.totalorder %s23, 2
      // Predicated region
      $region45: #{tpu_custom_call.1} parent=5 // pred_check
        %p293 = pneg %p292
      $region46: #{tpu_custom_call.1} parent=5 // pred_check_branch
        %295 = sbr.rel (%p293) target = $region48
      $region47: #{tpu_custom_call.1} parent=5 // pred_region
        // Predicated region
        $region49: #{tpu_custom_call.1} parent=47 // pred_check
          %p296 = pneg %p43
        $region50: #{tpu_custom_call.1} parent=47 // pred_check_branch
          %298 = sbr.rel (%p296) target = $region52
        $region51: #{tpu_custom_call.1} parent=47 // pred_region
          %s299 = sand.u32 %s33, 1
          %s300 = scalar_lea.sflag [#allocation5], %s299
          %s301 = sand.u32 %s33, 1
          %s302 = smul.addr %s301, 8
          %s303 = scalar_lea.vmem [#allocation4], %s302
          %s305 = ssub.s32 128, 128
          %306 = vsyncadd %s300, %s305
          %s307 = smul.addr %s23, 2
          %s308 = smul.addr %s307, 64
          %s309 = scalar_lea.hbm %s0, %s308
          %s311 = sshll.u32 %s303, 4
          %s312 = int_to_ptr.vmem [resolvable:$true] %s311
          %314 = dma.hbm_to_vmem [thread:$0]  %s309, 128, %s312, %s300
        $region52: #{tpu_custom_call.1} parent=47 // pred_fallthru
          _
      $region48: #{tpu_custom_call.1} parent=5 // pred_fallthru
        _
      %p315 = scmp.le.s32.totalorder 1, %s23
      %p316 = scmp.lt.s32.totalorder %s23, 3
      %p317 = pnand %p315, %p316
      %p318 = pneg %p317
      // Predicated region
      $region53: #{tpu_custom_call.1} parent=5 // pred_check
        _
      $region54: #{tpu_custom_call.1} parent=5 // pred_check_branch
        %320 = sbr.rel (%p317) target = $region56
      $region55: #{tpu_custom_call.1} parent=5 // pred_region
        %s321 = ssub.s32 %s23, 1
        %s322 = sand.u32 %s36, 1
        %s323 = scalar_lea.sflag [#allocation5], %s322
        %s324 = sand.u32 %s36, 1
        %s325 = smul.addr %s324, 8
        %s326 = scalar_lea.vmem [#allocation4], %s325
        // Predicated region
        $region57: #{tpu_custom_call.1} parent=55 // pred_check
          %p327 = pneg %p49
        $region58: #{tpu_custom_call.1} parent=55 // pred_check_branch
          %329 = sbr.rel (%p327) target = $region60
        $region59: #{tpu_custom_call.1} parent=55 // pred_region
          %330 = dma.done %s323, 128
        $region60: #{tpu_custom_call.1} parent=55 // pred_fallthru
          _
        // Predicated region
        $region61: #{tpu_custom_call.1} parent=55 // pred_check
          %p331 = pneg %p196
        $region62: #{tpu_custom_call.1} parent=55 // pred_check_branch
          %333 = sbr.rel (%p331) target = $region64
        $region63: #{tpu_custom_call.1} parent=55 // pred_region
          %334 = dma.done [#allocation8], 512
        $region64: #{tpu_custom_call.1} parent=55 // pred_fallthru
          _
        %s335 = sand.u32 %s36, 1
        %s336 = scalar_lea.sflag [#allocation5], %s335
        %s337 = sand.u32 %s36, 1
        %s338 = smul.addr %s337, 8
        %s339 = scalar_lea.vmem [#allocation4], %s338
        %p340 = pneg %p49
        %p341 = pneg %p46
        %p342 = pneg %p70
        %p343 = pneg %p67
        %p344 = pneg %p91
        %p345 = pneg %p88
        %p346 = pneg %p112
        %p347 = pneg %p109
        %p348 = pneg %p133
        %p349 = pneg %p130
        %p350 = pneg %p154
        %p351 = pneg %p151
        %p352 = pneg %p175
        %p353 = pneg %p172
        %p354 = pneg %p196
        %p355 = pneg %p193
        %p356 = pneg %p217
        %p357 = pneg %p214
        %p358 = pneg %p243
        %p359 = pneg %p240
        %s360 = sand.u32 %s230, 1
        %s361 = scalar_lea.sflag [#allocation6], %s360
        %s362 = sand.u32 %s230, 1
        %s363 = smul.addr %s362, 8
        %s364 = scalar_lea.vmem [#allocation9], %s363
        %s365 = sld [smem:[#allocation3]]
        %v366 = vld [vmem:[%s326] sm:$0xff]
        %v367 = vld [vmem:[%s1] sm:$0xf]
        %v369 = vcombine.high %v366, %v366
        %370 = vrot.lane.b32.xlu0 %v369, 17
        %v371 = vpop.permute.xlu0 %370
        %373 = vrot.lane.b32.xlu0 %v366, 17
        %v374 = vpop.permute.xlu0 %373
        %vm375 = vcmask 138240
        %v376 = vsel %vm375, %v374, %v371
        %v379 = vsel %vm375, %v371, %v374
        %v380 = vld [vmem:[#allocation7] ss:$8 sm:$0x3]
        %v382 = vlaneseq
        %v383 = vshrl.u32 %v382, 7
        %v384 = vsub.s32 0, %v383
        %v385 = vrot.slane %v380, %v384
        %v386 = vlaneseq
        %v387 = vshrl.u32 %v386, 7
        %v388 = vsub.s32 1, %v387
        %v389 = vrot.slane %v380, %v388
        %v392 = vmul.f32 %v379, %v385
        %v393 = vmul.f32 %v376, %v389
        %394 = vst [vmem:[#allocation2] sm:$0xf] %v392
        %395 = vst [vmem:[#allocation2 + $0x8] sm:$0xf] %v393
        %396 = vrot.lane.b32.xlu0 %v369, 16
        %v397 = vpop.permute.xlu0 %396
        %399 = vrot.lane.b32.xlu0 %v366, 16
        %v400 = vpop.permute.xlu0 %399
        %vm401 = vcmask 130048
        %v402 = vsel %vm401, %v400, %v397
        %v405 = vsel %vm401, %v397, %v400
        %s406 = scalar_lea.vmem [#allocation7], 1
        %v407 = vld [vmem:[%s406] ss:$8 sm:$0x3]
        %v409 = vlaneseq
        %v410 = vshrl.u32 %v409, 7
        %v411 = vsub.s32 0, %v410
        %v412 = vrot.slane %v407, %v411
        %v413 = vlaneseq
        %v414 = vshrl.u32 %v413, 7
        %v415 = vsub.s32 1, %v414
        %v416 = vrot.slane %v407, %v415
        %v419 = vmul.f32 %v405, %v412
        %v420 = vmul.f32 %v402, %v416
        %v423 = vrot.slane %v419, 4
        %v424 = vrot.slane %v420, 4
        %427 = vst [vmem:[#allocation2] sm:$0xf0] %v423
        %428 = vst [vmem:[#allocation2 + $0x8] sm:$0xf0] %v424
        %429 = vrot.lane.b32.xlu0 %v369, 15
        %v430 = vpop.permute.xlu0 %429
        %432 = vrot.lane.b32.xlu0 %v366, 15
        %v433 = vpop.permute.xlu0 %432
        %vm434 = vcmask 121856
        %v435 = vsel %vm434, %v433, %v430
        %v438 = vsel %vm434, %v430, %v433
        %s439 = scalar_lea.vmem [#allocation7], 2
        %v440 = vld [vmem:[%s439] ss:$8 sm:$0x3]
        %v442 = vlaneseq
        %v443 = vshrl.u32 %v442, 7
        %v444 = vsub.s32 0, %v443
        %v445 = vrot.slane %v440, %v444
        %v446 = vlaneseq
        %v447 = vshrl.u32 %v446, 7
        %v448 = vsub.s32 1, %v447
        %v449 = vrot.slane %v440, %v448
        %v452 = vmul.f32 %v438, %v445
        %v453 = vmul.f32 %v435, %v449
        %454 = vst [vmem:[#allocation2 + $0x10] sm:$0xf] %v452
        %455 = vst [vmem:[#allocation2 + $0x18] sm:$0xf] %v453
        %456 = vrot.lane.b32.xlu0 %v369, 1
        %v457 = vpop.permute.xlu0 %456
        %459 = vrot.lane.b32.xlu0 %v366, 1
        %v460 = vpop.permute.xlu0 %459
        %vm461 = vcmask 7168
        %v462 = vsel %vm461, %v460, %v457
        %v465 = vsel %vm461, %v457, %v460
        %s466 = scalar_lea.vmem [#allocation7], 3
        %v467 = vld [vmem:[%s466] ss:$8 sm:$0x3]
        %v469 = vlaneseq
        %v470 = vshrl.u32 %v469, 7
        %v471 = vsub.s32 0, %v470
        %v472 = vrot.slane %v467, %v471
        %v473 = vlaneseq
        %v474 = vshrl.u32 %v473, 7
        %v475 = vsub.s32 1, %v474
        %v476 = vrot.slane %v467, %v475
        %v479 = vmul.f32 %v465, %v472
        %v480 = vmul.f32 %v462, %v476
        %v483 = vrot.slane %v479, 4
        %v484 = vrot.slane %v480, 4
        %487 = vst [vmem:[#allocation2 + $0x10] sm:$0xf0] %v483
        %488 = vst [vmem:[#allocation2 + $0x18] sm:$0xf0] %v484
        %s489 = scalar_lea.vmem [#allocation7], 4
        %v490 = vld [vmem:[%s489] ss:$8 sm:$0x3]
        %v492 = vlaneseq
        %v493 = vshrl.u32 %v492, 7
        %v494 = vsub.s32 0, %v493
        %v495 = vrot.slane %v490, %v494
        %v496 = vlaneseq
        %v497 = vshrl.u32 %v496, 7
        %v498 = vsub.s32 1, %v497
        %v499 = vrot.slane %v490, %v498
        %v500 = vcombine.low %v495, %v499
        %v502 = vmul.f32 %v366, %v500
        %v504 = vcombine.high %v502, %v502
        %506 = vst [vmem:[#allocation2 + $0x20] sm:$0xf] %v502
        %507 = vst [vmem:[#allocation2 + $0x28] sm:$0xf] %v504
        %508 = vrot.lane.b32.xlu0 %v366, 127
        %v509 = vpop.permute.xlu0 %508
        %510 = vrot.lane.b32.xlu0 %v369, 127
        %v511 = vpop.permute.xlu0 %510
        %vm512 = vcmask 1039360
        %v513 = vsel %vm512, %v509, %v511
        %v517 = vsel %vm512, %v511, %v509
        %s518 = scalar_lea.vmem [#allocation7], 5
        %v519 = vld [vmem:[%s518] ss:$8 sm:$0x3]
        %v521 = vlaneseq
        %v522 = vshrl.u32 %v521, 7
        %v523 = vsub.s32 0, %v522
        %v524 = vrot.slane %v519, %v523
        %v525 = vlaneseq
        %v526 = vshrl.u32 %v525, 7
        %v527 = vsub.s32 1, %v526
        %v528 = vrot.slane %v519, %v527
        %v531 = vmul.f32 %v513, %v524
        %v532 = vmul.f32 %v517, %v528
        %v535 = vrot.slane %v531, 4
        %v536 = vrot.slane %v532, 4
        %539 = vst [vmem:[#allocation2 + $0x20] sm:$0xf0] %v535
        %540 = vst [vmem:[#allocation2 + $0x28] sm:$0xf0] %v536
        %541 = vrot.lane.b32.xlu0 %v366, 113
        %v542 = vpop.permute.xlu0 %541
        %543 = vrot.lane.b32.xlu0 %v369, 113
        %v544 = vpop.permute.xlu0 %543
        %vm545 = vcmask 924672
        %v546 = vsel %vm545, %v542, %v544
        %v550 = vsel %vm545, %v544, %v542
        %s551 = scalar_lea.vmem [#allocation7], 6
        %v552 = vld [vmem:[%s551] ss:$8 sm:$0x3]
        %v554 = vlaneseq
        %v555 = vshrl.u32 %v554, 7
        %v556 = vsub.s32 0, %v555
        %v557 = vrot.slane %v552, %v556
        %v558 = vlaneseq
        %v559 = vshrl.u32 %v558, 7
        %v560 = vsub.s32 1, %v559
        %v561 = vrot.slane %v552, %v560
        %v564 = vmul.f32 %v546, %v557
        %v565 = vmul.f32 %v550, %v561
        %566 = vst [vmem:[#allocation2 + $0x30] sm:$0xf] %v564
        %567 = vst [vmem:[#allocation2 + $0x38] sm:$0xf] %v565
        %568 = vrot.lane.b32.xlu0 %v366, 112
        %v569 = vpop.permute.xlu0 %568
        %570 = vrot.lane.b32.xlu0 %v369, 112
        %v571 = vpop.permute.xlu0 %570
        %vm572 = vcmask 916480
        %v573 = vsel %vm572, %v569, %v571
        %v577 = vsel %vm572, %v571, %v569
        %s578 = scalar_lea.vmem [#allocation7], 7
        %v579 = vld [vmem:[%s578] ss:$8 sm:$0x3]
        %v581 = vlaneseq
        %v582 = vshrl.u32 %v581, 7
        %v583 = vsub.s32 0, %v582
        %v584 = vrot.slane %v579, %v583
        %v585 = vlaneseq
        %v586 = vshrl.u32 %v585, 7
        %v587 = vsub.s32 1, %v586
        %v588 = vrot.slane %v579, %v587
        %v591 = vmul.f32 %v573, %v584
        %v592 = vmul.f32 %v577, %v588
        %v595 = vrot.slane %v591, 4
        %v596 = vrot.slane %v592, 4
        %599 = vst [vmem:[#allocation2 + $0x30] sm:$0xf0] %v595
        %600 = vst [vmem:[#allocation2 + $0x38] sm:$0xf0] %v596
        %601 = vrot.lane.b32.xlu0 %v366, 111
        %v602 = vpop.permute.xlu0 %601
        %603 = vrot.lane.b32.xlu0 %v369, 111
        %v604 = vpop.permute.xlu0 %603
        %vm605 = vcmask 908288
        %v606 = vsel %vm605, %v602, %v604
        %v610 = vsel %vm605, %v604, %v602
        %s611 = scalar_lea.vmem [#allocation7], 16
        %v612 = vld [vmem:[%s611] ss:$8 sm:$0x3]
        %v614 = vlaneseq
        %v615 = vshrl.u32 %v614, 7
        %v616 = vsub.s32 0, %v615
        %v617 = vrot.slane %v612, %v616
        %v618 = vlaneseq
        %v619 = vshrl.u32 %v618, 7
        %v620 = vsub.s32 1, %v619
        %v621 = vrot.slane %v612, %v620
        %v624 = vmul.f32 %v606, %v617
        %v625 = vmul.f32 %v610, %v621
        %626 = vst [vmem:[#allocation2 + $0x40] sm:$0xf] %v624
        %627 = vst [vmem:[#allocation2 + $0x48] sm:$0xf] %v625
        %v628 = vld [vmem:[#allocation2] sm:$0xff]
        %v629 = vld [vmem:[#allocation2 + $0x8] sm:$0xff]
        %v630 = vld [vmem:[#allocation2 + $0x10] sm:$0xff]
        %v631 = vld [vmem:[#allocation2 + $0x18] sm:$0xff]
        %v632 = vld [vmem:[#allocation2 + $0x20] sm:$0xff]
        %v633 = vld [vmem:[#allocation2 + $0x28] sm:$0xff]
        %v634 = vld [vmem:[#allocation2 + $0x30] sm:$0xff]
        %v635 = vld [vmem:[#allocation2 + $0x38] sm:$0xff]
        %v636 = vld [vmem:[#allocation2 + $0x40] sm:$0xf]
        %v637 = vld [vmem:[#allocation2 + $0x48] sm:$0xf]
        %vm638 = vcmask 293888
        %v640 = vsel %vm638, %v367, 0
        %vm642 = vcmask 1043456
        %v644 = vsel %vm642, %v636, 0
        %v647 = vsel %vm642, %v637, 0
        %649 = vmatprep.subr.mxu0 %v629
        %650 = vmatpush1.msra.mxu0 %v628
        %651 = vmatprep.subr.mxu0 %v631
        %652 = vmatpush1.msra.mxu0 %v630
        %653 = vmatprep.subr.mxu0 %v633
        %654 = vmatpush1.msra.mxu0 %v632
        %655 = vmatprep.subr.mxu0 %v635
        %656 = vmatpush1.msra.mxu0 %v634
        %657 = vmatprep.subr.mxu0 %v647
        %658 = vmatpush1.msra.mxu0 %v644
        %659 = vmatprep.subr.mxu0 0.0
        %660 = vmatpush1.msra.mxu0 0.0
        %661 = vmatprep.subr.mxu0 0.0
        %662 = vmatpush1.msra.mxu0 0.0
        %663 = vmatprep.subr.mxu0 0.0
        %664 = vmatpush1.msra.mxu0 0.0
        %665 = vmatprep.subr.mxu0 0.0
        %666 = vmatpush1.msra.mxu0 0.0
        %667 = vmatprep.subr.mxu0 0.0
        %668 = vmatpush1.msra.mxu0 0.0
        %669 = vmatprep.subr.mxu0 0.0
        %670 = vmatpush1.msra.mxu0 0.0
        %671 = vmatprep.subr.mxu0 0.0
        %672 = vmatpush1.msra.mxu0 0.0
        %673 = vmatprep.subr.mxu0 0.0
        %674 = vmatpush1.msra.mxu0 0.0
        %675 = vmatprep.subr.mxu0 0.0
        %676 = vmatpush1.msra.mxu0 0.0
        %677 = vmatprep.subr.mxu0 0.0
        %678 = vmatpush1.msra.mxu0 0.0
        %679 = vmatprep.subr.mxu0 0.0
        %680 = vmatpush1.msra.mxu0 0.0
        %681 = vmatprep.subr.mxu0 0.0
        %682 = vmatpush1.msra.mxu0 0.0
        %683 = vmatprep.subr.mxu0 0.0
        %684 = vmatpush1.msra.mxu0 0.0
        %685 = vmatprep.subr.mxu0 0.0
        %686 = vmatpush1.msra.mxu0 0.0
        %687 = vmatprep.subr.mxu0 0.0
        %688 = vmatpush1.msra.mxu0 0.0
        %689 = vmatprep.subr.mxu0 0.0
        %690 = vmatpush1.msra.mxu0 0.0
        %691 = vmatprep.subr.mxu0 0.0
        %692 = vmatpush1.msra.mxu0 0.0
        %693 = vmatprep.subr.mxu0 0.0
        %694 = vmatpush1.msra.mxu0 0.0
        %695 = vmatprep.subr.mxu0 0.0
        %696 = vmatpush1.msra.mxu0 0.0
        %697 = vmatprep.subr.mxu0 0.0
        %698 = vmatpush1.msra.mxu0 0.0
        %699 = vmatprep.subr.mxu0 0.0
        %700 = vmatpush1.msra.mxu0 0.0
        %701 = vmatprep.subr.mxu0 0.0
        %702 = vmatpush1.msra.mxu0 0.0
        %703 = vmatprep.subr.mxu0 0.0
        %704 = vmatpush1.msra.mxu0 0.0
        %705 = vmatprep.subr.mxu0 0.0
        %706 = vmatpush1.msra.mxu0 0.0
        %707 = vmatprep.subr.mxu0 0.0
        %708 = vmatpush1.msra.mxu0 0.0
        %709 = vmatprep.subr.mxu0 0.0
        %710 = vmatpush1.msra.mxu0 0.0
        %711 = vmatprep.subr.mxu0 0.0
        %712 = vmatpush1.msra.mxu0 0.0
        %713 = vmatprep.mubr.f32.mxu0 0.0
        %714 = vmatmul.mubr.f32.gmra.mrb[0].mxu0 %v640
        %v715 = vpop.f32.mrb[0].mxu0
        %v716 = vadd.f32 0.0, %v715
        %v717 = vpop.f32.mrb[0].mxu0
        %v718 = vadd.f32 0.0, %v717
        %719 = vdwg.mxu0
        %vm720 = vcmp.ge.f32.partialorder %v716, 0.0
        %vm721 = vcmp.ge.f32.partialorder %v718, 0.0
        %v722 = vstv %s365
        %v723 = vmul.f32 %v722, %v716
        %v724 = vmul.f32 %v722, %v718
        %v725 = vsel %vm720, %v716, %v723
        %v726 = vsel %vm721, %v718, %v724
        %v727 = vld [vmem:[%s4] sm:$0xf]
        %vm728 = vcmask 31744
        %v730 = vsel %vm728, %v727, 0
        %v733 = vsel %vm642, %v725, 0
        %v736 = vsel %vm642, %v726, 0
        %738 = vmatprep.subr.mxu0 %v736
        %739 = vmatpush1.msra.mxu0 %v733
        %740 = vmatprep.subr.mxu0 0.0
        %741 = vmatpush1.msra.mxu0 0.0
        %742 = vmatprep.subr.mxu0 0.0
        %743 = vmatpush1.msra.mxu0 0.0
        %744 = vmatprep.subr.mxu0 0.0
        %745 = vmatpush1.msra.mxu0 0.0
        %746 = vmatprep.subr.mxu0 0.0
        %747 = vmatpush1.msra.mxu0 0.0
        %748 = vmatprep.subr.mxu0 0.0
        %749 = vmatpush1.msra.mxu0 0.0
        %750 = vmatprep.subr.mxu0 0.0
        %751 = vmatpush1.msra.mxu0 0.0
        %752 = vmatprep.subr.mxu0 0.0
        %753 = vmatpush1.msra.mxu0 0.0
        %754 = vmatprep.subr.mxu0 0.0
        %755 = vmatpush1.msra.mxu0 0.0
        %756 = vmatprep.subr.mxu0 0.0
        %757 = vmatpush1.msra.mxu0 0.0
        %758 = vmatprep.subr.mxu0 0.0
        %759 = vmatpush1.msra.mxu0 0.0
        %760 = vmatprep.subr.mxu0 0.0
        %761 = vmatpush1.msra.mxu0 0.0
        %762 = vmatprep.subr.mxu0 0.0
        %763 = vmatpush1.msra.mxu0 0.0
        %764 = vmatprep.subr.mxu0 0.0
        %765 = vmatpush1.msra.mxu0 0.0
        %766 = vmatprep.subr.mxu0 0.0
        %767 = vmatpush1.msra.mxu0 0.0
        %768 = vmatprep.subr.mxu0 0.0
        %769 = vmatpush1.msra.mxu0 0.0
        %770 = vmatprep.subr.mxu0 0.0
        %771 = vmatpush1.msra.mxu0 0.0
        %772 = vmatprep.subr.mxu0 0.0
        %773 = vmatpush1.msra.mxu0 0.0
        %774 = vmatprep.subr.mxu0 0.0
        %775 = vmatpush1.msra.mxu0 0.0
        %776 = vmatprep.subr.mxu0 0.0
        %777 = vmatpush1.msra.mxu0 0.0
        %778 = vmatprep.subr.mxu0 0.0
        %779 = vmatpush1.msra.mxu0 0.0
        %780 = vmatprep.subr.mxu0 0.0
        %781 = vmatpush1.msra.mxu0 0.0
        %782 = vmatprep.subr.mxu0 0.0
        %783 = vmatpush1.msra.mxu0 0.0
        %784 = vmatprep.subr.mxu0 0.0
        %785 = vmatpush1.msra.mxu0 0.0
        %786 = vmatprep.subr.mxu0 0.0
        %787 = vmatpush1.msra.mxu0 0.0
        %788 = vmatprep.subr.mxu0 0.0
        %789 = vmatpush1.msra.mxu0 0.0
        %790 = vmatprep.subr.mxu0 0.0
        %791 = vmatpush1.msra.mxu0 0.0
        %792 = vmatprep.subr.mxu0 0.0
        %793 = vmatpush1.msra.mxu0 0.0
        %794 = vmatprep.subr.mxu0 0.0
        %795 = vmatpush1.msra.mxu0 0.0
        %796 = vmatprep.subr.mxu0 0.0
        %797 = vmatpush1.msra.mxu0 0.0
        %798 = vmatprep.subr.mxu0 0.0
        %799 = vmatpush1.msra.mxu0 0.0
        %800 = vmatprep.subr.mxu0 0.0
        %801 = vmatpush1.msra.mxu0 0.0
        %802 = vmatprep.mubr.f32.mxu0 0.0
        %803 = vmatmul.mubr.f32.gmra.mrb[0].mxu0 %v730
        %v804 = vpop.f32.mrb[0].mxu0
        %v805 = vadd.f32 0.0, %v804
        %v806 = vpop.f32.mrb[0].mxu0
        %v807 = vadd.f32 0.0, %v806
        %808 = vdwg.mxu0
        %v809 = vld [vmem:[%s5] sm:$0xf]
        %v811 = vsel %vm728, %v809, 0
        %813 = vmatprep.subr.mxu0 %v736
        %814 = vmatpush1.msra.mxu0 %v733
        %815 = vmatprep.subr.mxu0 0.0
        %816 = vmatpush1.msra.mxu0 0.0
        %817 = vmatprep.subr.mxu0 0.0
        %818 = vmatpush1.msra.mxu0 0.0
        %819 = vmatprep.subr.mxu0 0.0
        %820 = vmatpush1.msra.mxu0 0.0
        %821 = vmatprep.subr.mxu0 0.0
        %822 = vmatpush1.msra.mxu0 0.0
        %823 = vmatprep.subr.mxu0 0.0
        %824 = vmatpush1.msra.mxu0 0.0
        %825 = vmatprep.subr.mxu0 0.0
        %826 = vmatpush1.msra.mxu0 0.0
        %827 = vmatprep.subr.mxu0 0.0
        %828 = vmatpush1.msra.mxu0 0.0
        %829 = vmatprep.subr.mxu0 0.0
        %830 = vmatpush1.msra.mxu0 0.0
        %831 = vmatprep.subr.mxu0 0.0
        %832 = vmatpush1.msra.mxu0 0.0
        %833 = vmatprep.subr.mxu0 0.0
        %834 = vmatpush1.msra.mxu0 0.0
        %835 = vmatprep.subr.mxu0 0.0
        %836 = vmatpush1.msra.mxu0 0.0
        %837 = vmatprep.subr.mxu0 0.0
        %838 = vmatpush1.msra.mxu0 0.0
        %839 = vmatprep.subr.mxu0 0.0
        %840 = vmatpush1.msra.mxu0 0.0
        %841 = vmatprep.subr.mxu0 0.0
        %842 = vmatpush1.msra.mxu0 0.0
        %843 = vmatprep.subr.mxu0 0.0
        %844 = vmatpush1.msra.mxu0 0.0
        %845 = vmatprep.subr.mxu0 0.0
        %846 = vmatpush1.msra.mxu0 0.0
        %847 = vmatprep.subr.mxu0 0.0
        %848 = vmatpush1.msra.mxu0 0.0
        %849 = vmatprep.subr.mxu0 0.0
        %850 = vmatpush1.msra.mxu0 0.0
        %851 = vmatprep.subr.mxu0 0.0
        %852 = vmatpush1.msra.mxu0 0.0
        %853 = vmatprep.subr.mxu0 0.0
        %854 = vmatpush1.msra.mxu0 0.0
        %855 = vmatprep.subr.mxu0 0.0
        %856 = vmatpush1.msra.mxu0 0.0
        %857 = vmatprep.subr.mxu0 0.0
        %858 = vmatpush1.msra.mxu0 0.0
        %859 = vmatprep.subr.mxu0 0.0
        %860 = vmatpush1.msra.mxu0 0.0
        %861 = vmatprep.subr.mxu0 0.0
        %862 = vmatpush1.msra.mxu0 0.0
        %863 = vmatprep.subr.mxu0 0.0
        %864 = vmatpush1.msra.mxu0 0.0
        %865 = vmatprep.subr.mxu0 0.0
        %866 = vmatpush1.msra.mxu0 0.0
        %867 = vmatprep.subr.mxu0 0.0
        %868 = vmatpush1.msra.mxu0 0.0
        %869 = vmatprep.subr.mxu0 0.0
        %870 = vmatpush1.msra.mxu0 0.0
        %871 = vmatprep.subr.mxu0 0.0
        %872 = vmatpush1.msra.mxu0 0.0
        %873 = vmatprep.subr.mxu0 0.0
        %874 = vmatpush1.msra.mxu0 0.0
        %875 = vmatprep.subr.mxu0 0.0
        %876 = vmatpush1.msra.mxu0 0.0
        %877 = vmatprep.mubr.f32.mxu0 0.0
        %878 = vmatmul.mubr.f32.gmra.mrb[0].mxu0 %v811
        %v879 = vpop.f32.mrb[0].mxu0
        %v880 = vadd.f32 0.0, %v879
        %v881 = vpop.f32.mrb[0].mxu0
        %v882 = vadd.f32 0.0, %v881
        %883 = vdwg.mxu0
        %v884 = vld [vmem:[%s3] sm:$0xf]
        %v886 = vsel %vm728, %v884, 0
        %888 = vmatprep.subr.mxu0 %v736
        %889 = vmatpush1.msra.mxu0 %v733
        %890 = vmatprep.subr.mxu0 0.0
        %891 = vmatpush1.msra.mxu0 0.0
        %892 = vmatprep.subr.mxu0 0.0
        %893 = vmatpush1.msra.mxu0 0.0
        %894 = vmatprep.subr.mxu0 0.0
        %895 = vmatpush1.msra.mxu0 0.0
        %896 = vmatprep.subr.mxu0 0.0
        %897 = vmatpush1.msra.mxu0 0.0
        %898 = vmatprep.subr.mxu0 0.0
        %899 = vmatpush1.msra.mxu0 0.0
        %900 = vmatprep.subr.mxu0 0.0
        %901 = vmatpush1.msra.mxu0 0.0
        %902 = vmatprep.subr.mxu0 0.0
        %903 = vmatpush1.msra.mxu0 0.0
        %904 = vmatprep.subr.mxu0 0.0
        %905 = vmatpush1.msra.mxu0 0.0
        %906 = vmatprep.subr.mxu0 0.0
        %907 = vmatpush1.msra.mxu0 0.0
        %908 = vmatprep.subr.mxu0 0.0
        %909 = vmatpush1.msra.mxu0 0.0
        %910 = vmatprep.subr.mxu0 0.0
        %911 = vmatpush1.msra.mxu0 0.0
        %912 = vmatprep.subr.mxu0 0.0
        %913 = vmatpush1.msra.mxu0 0.0
        %914 = vmatprep.subr.mxu0 0.0
        %915 = vmatpush1.msra.mxu0 0.0
        %916 = vmatprep.subr.mxu0 0.0
        %917 = vmatpush1.msra.mxu0 0.0
        %918 = vmatprep.subr.mxu0 0.0
        %919 = vmatpush1.msra.mxu0 0.0
        %920 = vmatprep.subr.mxu0 0.0
        %921 = vmatpush1.msra.mxu0 0.0
        %922 = vmatprep.subr.mxu0 0.0
        %923 = vmatpush1.msra.mxu0 0.0
        %924 = vmatprep.subr.mxu0 0.0
        %925 = vmatpush1.msra.mxu0 0.0
        %926 = vmatprep.subr.mxu0 0.0
        %927 = vmatpush1.msra.mxu0 0.0
        %928 = vmatprep.subr.mxu0 0.0
        %929 = vmatpush1.msra.mxu0 0.0
        %930 = vmatprep.subr.mxu0 0.0
        %931 = vmatpush1.msra.mxu0 0.0
        %932 = vmatprep.subr.mxu0 0.0
        %933 = vmatpush1.msra.mxu0 0.0
        %934 = vmatprep.subr.mxu0 0.0
        %935 = vmatpush1.msra.mxu0 0.0
        %936 = vmatprep.subr.mxu0 0.0
        %937 = vmatpush1.msra.mxu0 0.0
        %938 = vmatprep.subr.mxu0 0.0
        %939 = vmatpush1.msra.mxu0 0.0
        %940 = vmatprep.subr.mxu0 0.0
        %941 = vmatpush1.msra.mxu0 0.0
        %942 = vmatprep.subr.mxu0 0.0
        %943 = vmatpush1.msra.mxu0 0.0
        %944 = vmatprep.subr.mxu0 0.0
        %945 = vmatpush1.msra.mxu0 0.0
        %946 = vmatprep.subr.mxu0 0.0
        %947 = vmatpush1.msra.mxu0 0.0
        %948 = vmatprep.subr.mxu0 0.0
        %949 = vmatpush1.msra.mxu0 0.0
        %950 = vmatprep.subr.mxu0 0.0
        %951 = vmatpush1.msra.mxu0 0.0
        %952 = vmatprep.mubr.f32.mxu0 0.0
        %953 = vmatmul.mubr.f32.gmra.mrb[0].mxu0 %v886
        %v954 = vpop.f32.mrb[0].mxu0
        %v955 = vadd.f32 0.0, %v954
        %v956 = vpop.f32.mrb[0].mxu0
        %v957 = vadd.f32 0.0, %v956
        %958 = vdwg.mxu0
        %959 = vxpose.xlu0.b32.start [1/16] %v880, 128
        %960 = vxpose.xlu0.b32.cont [2/16] 0.0, 128
        %961 = vxpose.xlu0.b32.cont [3/16] 0.0, 128
        %962 = vxpose.xlu0.b32.cont [4/16] 0.0, 128
        %963 = vxpose.xlu0.b32.cont [5/16] 0.0, 128
        %964 = vxpose.xlu0.b32.cont [6/16] 0.0, 128
        %965 = vxpose.xlu0.b32.cont [7/16] 0.0, 128
        %966 = vxpose.xlu0.b32.cont [8/16] 0.0, 128
        %967 = vxpose.xlu0.b32.cont [9/16] 0.0, 128
        %968 = vxpose.xlu0.b32.cont [10/16] 0.0, 128
        %969 = vxpose.xlu0.b32.cont [11/16] 0.0, 128
        %970 = vxpose.xlu0.b32.cont [12/16] 0.0, 128
        %971 = vxpose.xlu0.b32.cont [13/16] 0.0, 128
        %972 = vxpose.xlu0.b32.cont [14/16] 0.0, 128
        %973 = vxpose.xlu0.b32.cont [15/16] 0.0, 128
        %974 = vxpose.xlu0.b32.end [16/16] 0.0, 128
        %v975 = vpop.trf.xlu0
        %v976 = vpop.trf.xlu0
        %v977 = vpop.trf.xlu0
        %v978 = vpop.trf.xlu0
        %v979 = vpop.trf.xlu0
        %v980 = vpop.trf.xlu0
        %v981 = vpop.trf.xlu0
        %v982 = vpop.trf.xlu0
        %v983 = vpop.trf.xlu0
        %v984 = vpop.trf.xlu0
        %v985 = vpop.trf.xlu0
        %v986 = vpop.trf.xlu0
        %v987 = vpop.trf.xlu0
        %v988 = vpop.trf.xlu0
        %v989 = vpop.trf.xlu0
        %v990 = vpop.trf.xlu0
        %991 = vxpose.xlu0.b32.start [1/16] %v882, 128
        %992 = vxpose.xlu0.b32.cont [2/16] 0.0, 128
        %993 = vxpose.xlu0.b32.cont [3/16] 0.0, 128
        %994 = vxpose.xlu0.b32.cont [4/16] 0.0, 128
        %995 = vxpose.xlu0.b32.cont [5/16] 0.0, 128
        %996 = vxpose.xlu0.b32.cont [6/16] 0.0, 128
        %997 = vxpose.xlu0.b32.cont [7/16] 0.0, 128
        %998 = vxpose.xlu0.b32.cont [8/16] 0.0, 128
        %999 = vxpose.xlu0.b32.cont [9/16] 0.0, 128
        %1000 = vxpose.xlu0.b32.cont [10/16] 0.0, 128
        %1001 = vxpose.xlu0.b32.cont [11/16] 0.0, 128
        %1002 = vxpose.xlu0.b32.cont [12/16] 0.0, 128
        %1003 = vxpose.xlu0.b32.cont [13/16] 0.0, 128
        %1004 = vxpose.xlu0.b32.cont [14/16] 0.0, 128
        %1005 = vxpose.xlu0.b32.cont [15/16] 0.0, 128
        %1006 = vxpose.xlu0.b32.end [16/16] 0.0, 128
        %v1007 = vpop.trf.xlu0
        %v1008 = vpop.trf.xlu0
        %v1009 = vpop.trf.xlu0
        %v1010 = vpop.trf.xlu0
        %v1011 = vpop.trf.xlu0
        %v1012 = vpop.trf.xlu0
        %v1013 = vpop.trf.xlu0
        %v1014 = vpop.trf.xlu0
        %v1015 = vpop.trf.xlu0
        %v1016 = vpop.trf.xlu0
        %v1017 = vpop.trf.xlu0
        %v1018 = vpop.trf.xlu0
        %v1019 = vpop.trf.xlu0
        %v1020 = vpop.trf.xlu0
        %v1021 = vpop.trf.xlu0
        %v1022 = vpop.trf.xlu0
        %v1024 = vsel %vm728, %v975, 0
        %v1027 = vsel %vm728, %v976, 0
        %v1030 = vsel %vm728, %v977, 0
        %v1033 = vsel %vm728, %v978, 0
        %v1036 = vsel %vm728, %v979, 0
        %v1039 = vsel %vm728, %v980, 0
        %v1042 = vsel %vm728, %v981, 0
        %v1045 = vsel %vm728, %v982, 0
        %v1048 = vsel %vm728, %v983, 0
        %v1051 = vsel %vm728, %v984, 0
        %v1054 = vsel %vm728, %v985, 0
        %v1057 = vsel %vm728, %v986, 0
        %v1060 = vsel %vm728, %v987, 0
        %v1063 = vsel %vm728, %v988, 0
        %v1066 = vsel %vm728, %v989, 0
        %v1069 = vsel %vm728, %v990, 0
        %v1072 = vsel %vm728, %v1007, 0
        %v1075 = vsel %vm728, %v1008, 0
        %v1078 = vsel %vm728, %v1009, 0
        %v1081 = vsel %vm728, %v1010, 0
        %v1084 = vsel %vm728, %v1011, 0
        %v1087 = vsel %vm728, %v1012, 0
        %v1090 = vsel %vm728, %v1013, 0
        %v1093 = vsel %vm728, %v1014, 0
        %v1096 = vsel %vm728, %v1015, 0
        %v1099 = vsel %vm728, %v1016, 0
        %v1102 = vsel %vm728, %v1017, 0
        %v1105 = vsel %vm728, %v1018, 0
        %v1108 = vsel %vm728, %v1019, 0
        %v1111 = vsel %vm728, %v1020, 0
        %v1114 = vsel %vm728, %v1021, 0
        %v1117 = vsel %vm728, %v1022, 0
        %v1120 = vsel %vm642, %v805, 0
        %v1123 = vsel %vm642, %v807, 0
        %1125 = vmatprep.subr.mxu0 %v1123
        %1126 = vmatpush1.msra.mxu0 %v1120
        %1127 = vmatprep.subr.mxu0 0.0
        %1128 = vmatpush1.msra.mxu0 0.0
        %1129 = vmatprep.subr.mxu0 0.0
        %1130 = vmatpush1.msra.mxu0 0.0
        %1131 = vmatprep.subr.mxu0 0.0
        %1132 = vmatpush1.msra.mxu0 0.0
        %1133 = vmatprep.subr.mxu0 0.0
        %1134 = vmatpush1.msra.mxu0 0.0
        %1135 = vmatprep.subr.mxu0 0.0
        %1136 = vmatpush1.msra.mxu0 0.0
        %1137 = vmatprep.subr.mxu0 0.0
        %1138 = vmatpush1.msra.mxu0 0.0
        %1139 = vmatprep.subr.mxu0 0.0
        %1140 = vmatpush1.msra.mxu0 0.0
        %1141 = vmatprep.subr.mxu0 0.0
        %1142 = vmatpush1.msra.mxu0 0.0
        %1143 = vmatprep.subr.mxu0 0.0
        %1144 = vmatpush1.msra.mxu0 0.0
        %1145 = vmatprep.subr.mxu0 0.0
        %1146 = vmatpush1.msra.mxu0 0.0
        %1147 = vmatprep.subr.mxu0 0.0
        %1148 = vmatpush1.msra.mxu0 0.0
        %1149 = vmatprep.subr.mxu0 0.0
        %1150 = vmatpush1.msra.mxu0 0.0
        %1151 = vmatprep.subr.mxu0 0.0
        %1152 = vmatpush1.msra.mxu0 0.0
        %1153 = vmatprep.subr.mxu0 0.0
        %1154 = vmatpush1.msra.mxu0 0.0
        %1155 = vmatprep.subr.mxu0 0.0
        %1156 = vmatpush1.msra.mxu0 0.0
        %1157 = vmatprep.subr.mxu0 0.0
        %1158 = vmatpush1.msra.mxu0 0.0
        %1159 = vmatprep.subr.mxu0 0.0
        %1160 = vmatpush1.msra.mxu0 0.0
        %1161 = vmatprep.subr.mxu0 0.0
        %1162 = vmatpush1.msra.mxu0 0.0
        %1163 = vmatprep.subr.mxu0 0.0
        %1164 = vmatpush1.msra.mxu0 0.0
        %1165 = vmatprep.subr.mxu0 0.0
        %1166 = vmatpush1.msra.mxu0 0.0
        %1167 = vmatprep.subr.mxu0 0.0
        %1168 = vmatpush1.msra.mxu0 0.0
        %1169 = vmatprep.subr.mxu0 0.0
        %1170 = vmatpush1.msra.mxu0 0.0
        %1171 = vmatprep.subr.mxu0 0.0
        %1172 = vmatpush1.msra.mxu0 0.0
        %1173 = vmatprep.subr.mxu0 0.0
        %1174 = vmatpush1.msra.mxu0 0.0
        %1175 = vmatprep.subr.mxu0 0.0
        %1176 = vmatpush1.msra.mxu0 0.0
        %1177 = vmatprep.subr.mxu0 0.0
        %1178 = vmatpush1.msra.mxu0 0.0
        %1179 = vmatprep.subr.mxu0 0.0
        %1180 = vmatpush1.msra.mxu0 0.0
        %1181 = vmatprep.subr.mxu0 0.0
        %1182 = vmatpush1.msra.mxu0 0.0
        %1183 = vmatprep.subr.mxu0 0.0
        %1184 = vmatpush1.msra.mxu0 0.0
        %1185 = vmatprep.subr.mxu0 0.0
        %1186 = vmatpush1.msra.mxu0 0.0
        %1187 = vmatprep.subr.mxu0 0.0
        %1188 = vmatpush1.msra.mxu0 0.0
        %1189 = vmatprep.mubr.f32.mxu0 0.0
        %1190 = vmatmul.mubr.f32.gmra.mrb[0].mxu0 %v1024
        %v1191 = vpop.f32.mrb[0].mxu0
        %v1192 = vadd.f32 0.0, %v1191
        %v1193 = vpop.f32.mrb[0].mxu0
        %v1194 = vadd.f32 0.0, %v1193
        %1195 = vmatprep.mubr.f32.mxu0 0.0
        %1196 = vmatmul.mubr.f32.gmra.mrb[0].mxu0 %v1027
        %v1197 = vpop.f32.mrb[0].mxu0
        %v1198 = vadd.f32 0.0, %v1197
        %v1199 = vpop.f32.mrb[0].mxu0
        %v1200 = vadd.f32 0.0, %v1199
        %1201 = vmatprep.mubr.f32.mxu0 0.0
        %1202 = vmatmul.mubr.f32.gmra.mrb[0].mxu0 %v1030
        %v1203 = vpop.f32.mrb[0].mxu0
        %v1204 = vadd.f32 0.0, %v1203
        %v1205 = vpop.f32.mrb[0].mxu0
        %v1206 = vadd.f32 0.0, %v1205
        %1207 = vmatprep.mubr.f32.mxu0 0.0
        %1208 = vmatmul.mubr.f32.gmra.mrb[0].mxu0 %v1033
        %v1209 = vpop.f32.mrb[0].mxu0
        %v1210 = vadd.f32 0.0, %v1209
        %v1211 = vpop.f32.mrb[0].mxu0
        %v1212 = vadd.f32 0.0, %v1211
        %1213 = vmatprep.mubr.f32.mxu0 0.0
        %1214 = vmatmul.mubr.f32.gmra.mrb[0].mxu0 %v1036
        %v1215 = vpop.f32.mrb[0].mxu0
        %v1216 = vadd.f32 0.0, %v1215
        %v1217 = vpop.f32.mrb[0].mxu0
        %v1218 = vadd.f32 0.0, %v1217
        %1219 = vmatprep.mubr.f32.mxu0 0.0
        %1220 = vmatmul.mubr.f32.gmra.mrb[0].mxu0 %v1039
        %v1221 = vpop.f32.mrb[0].mxu0
        %v1222 = vadd.f32 0.0, %v1221
        %v1223 = vpop.f32.mrb[0].mxu0
        %v1224 = vadd.f32 0.0, %v1223
        %1225 = vmatprep.mubr.f32.mxu0 0.0
        %1226 = vmatmul.mubr.f32.gmra.mrb[0].mxu0 %v1042
        %v1227 = vpop.f32.mrb[0].mxu0
        %v1228 = vadd.f32 0.0, %v1227
        %v1229 = vpop.f32.mrb[0].mxu0
        %v1230 = vadd.f32 0.0, %v1229
        %1231 = vmatprep.mubr.f32.mxu0 0.0
        %1232 = vmatmul.mubr.f32.gmra.mrb[0].mxu0 %v1045
        %v1233 = vpop.f32.mrb[0].mxu0
        %v1234 = vadd.f32 0.0, %v1233
        %v1235 = vpop.f32.mrb[0].mxu0
        %v1236 = vadd.f32 0.0, %v1235
        %1237 = vmatprep.mubr.f32.mxu0 0.0
        %1238 = vmatmul.mubr.f32.gmra.mrb[0].mxu0 %v1048
        %v1239 = vpop.f32.mrb[0].mxu0
        %v1240 = vadd.f32 0.0, %v1239
        %v1241 = vpop.f32.mrb[0].mxu0
        %v1242 = vadd.f32 0.0, %v1241
        %1243 = vmatprep.mubr.f32.mxu0 0.0
        %1244 = vmatmul.mubr.f32.gmra.mrb[0].mxu0 %v1051
        %v1245 = vpop.f32.mrb[0].mxu0
        %v1246 = vadd.f32 0.0, %v1245
        %v1247 = vpop.f32.mrb[0].mxu0
        %v1248 = vadd.f32 0.0, %v1247
        %1249 = vmatprep.mubr.f32.mxu0 0.0
        %1250 = vmatmul.mubr.f32.gmra.mrb[0].mxu0 %v1054
        %v1251 = vpop.f32.mrb[0].mxu0
        %v1252 = vadd.f32 0.0, %v1251
        %v1253 = vpop.f32.mrb[0].mxu0
        %v1254 = vadd.f32 0.0, %v1253
        %1255 = vmatprep.mubr.f32.mxu0 0.0
        %1256 = vmatmul.mubr.f32.gmra.mrb[0].mxu0 %v1057
        %v1257 = vpop.f32.mrb[0].mxu0
        %v1258 = vadd.f32 0.0, %v1257
        %v1259 = vpop.f32.mrb[0].mxu0
        %v1260 = vadd.f32 0.0, %v1259
        %1261 = vmatprep.mubr.f32.mxu0 0.0
        %1262 = vmatmul.mubr.f32.gmra.mrb[0].mxu0 %v1060
        %v1263 = vpop.f32.mrb[0].mxu0
        %v1264 = vadd.f32 0.0, %v1263
        %v1265 = vpop.f32.mrb[0].mxu0
        %v1266 = vadd.f32 0.0, %v1265
        %1267 = vmatprep.mubr.f32.mxu0 0.0
        %1268 = vmatmul.mubr.f32.gmra.mrb[0].mxu0 %v1063
        %v1269 = vpop.f32.mrb[0].mxu0
        %v1270 = vadd.f32 0.0, %v1269
        %v1271 = vpop.f32.mrb[0].mxu0
        %v1272 = vadd.f32 0.0, %v1271
        %1273 = vmatprep.mubr.f32.mxu0 0.0
        %1274 = vmatmul.mubr.f32.gmra.mrb[0].mxu0 %v1066
        %v1275 = vpop.f32.mrb[0].mxu0
        %v1276 = vadd.f32 0.0, %v1275
        %v1277 = vpop.f32.mrb[0].mxu0
        %v1278 = vadd.f32 0.0, %v1277
        %1279 = vmatprep.mubr.f32.mxu0 0.0
        %1280 = vmatmul.mubr.f32.gmra.mrb[0].mxu0 %v1069
        %v1281 = vpop.f32.mrb[0].mxu0
        %v1282 = vadd.f32 0.0, %v1281
        %v1283 = vpop.f32.mrb[0].mxu0
        %v1284 = vadd.f32 0.0, %v1283
        %1285 = vmatprep.mubr.f32.mxu0 0.0
        %1286 = vmatmul.mubr.f32.gmra.mrb[0].mxu0 %v1072
        %v1287 = vpop.f32.mrb[0].mxu0
        %v1288 = vadd.f32 0.0, %v1287
        %v1289 = vpop.f32.mrb[0].mxu0
        %v1290 = vadd.f32 0.0, %v1289
        %1291 = vmatprep.mubr.f32.mxu0 0.0
        %1292 = vmatmul.mubr.f32.gmra.mrb[0].mxu0 %v1075
        %v1293 = vpop.f32.mrb[0].mxu0
        %v1294 = vadd.f32 0.0, %v1293
        %v1295 = vpop.f32.mrb[0].mxu0
        %v1296 = vadd.f32 0.0, %v1295
        %1297 = vmatprep.mubr.f32.mxu0 0.0
        %1298 = vmatmul.mubr.f32.gmra.mrb[0].mxu0 %v1078
        %v1299 = vpop.f32.mrb[0].mxu0
        %v1300 = vadd.f32 0.0, %v1299
        %v1301 = vpop.f32.mrb[0].mxu0
        %v1302 = vadd.f32 0.0, %v1301
        %1303 = vmatprep.mubr.f32.mxu0 0.0
        %1304 = vmatmul.mubr.f32.gmra.mrb[0].mxu0 %v1081
        %v1305 = vpop.f32.mrb[0].mxu0
        %v1306 = vadd.f32 0.0, %v1305
        %v1307 = vpop.f32.mrb[0].mxu0
        %v1308 = vadd.f32 0.0, %v1307
        %1309 = vmatprep.mubr.f32.mxu0 0.0
        %1310 = vmatmul.mubr.f32.gmra.mrb[0].mxu0 %v1084
        %v1311 = vpop.f32.mrb[0].mxu0
        %v1312 = vadd.f32 0.0, %v1311
        %v1313 = vpop.f32.mrb[0].mxu0
        %v1314 = vadd.f32 0.0, %v1313
        %1315 = vmatprep.mubr.f32.mxu0 0.0
        %1316 = vmatmul.mubr.f32.gmra.mrb[0].mxu0 %v1087
        %v1317 = vpop.f32.mrb[0].mxu0
        %v1318 = vadd.f32 0.0, %v1317
        %v1319 = vpop.f32.mrb[0].mxu0
        %v1320 = vadd.f32 0.0, %v1319
        %1321 = vmatprep.mubr.f32.mxu0 0.0
        %1322 = vmatmul.mubr.f32.gmra.mrb[0].mxu0 %v1090
        %v1323 = vpop.f32.mrb[0].mxu0
        %v1324 = vadd.f32 0.0, %v1323
        %v1325 = vpop.f32.mrb[0].mxu0
        %v1326 = vadd.f32 0.0, %v1325
        %1327 = vmatprep.mubr.f32.mxu0 0.0
        %1328 = vmatmul.mubr.f32.gmra.mrb[0].mxu0 %v1093
        %v1329 = vpop.f32.mrb[0].mxu0
        %v1330 = vadd.f32 0.0, %v1329
        %v1331 = vpop.f32.mrb[0].mxu0
        %v1332 = vadd.f32 0.0, %v1331
        %1333 = vmatprep.mubr.f32.mxu0 0.0
        %1334 = vmatmul.mubr.f32.gmra.mrb[0].mxu0 %v1096
        %v1335 = vpop.f32.mrb[0].mxu0
        %v1336 = vadd.f32 0.0, %v1335
        %v1337 = vpop.f32.mrb[0].mxu0
        %v1338 = vadd.f32 0.0, %v1337
        %1339 = vmatprep.mubr.f32.mxu0 0.0
        %1340 = vmatmul.mubr.f32.gmra.mrb[0].mxu0 %v1099
        %v1341 = vpop.f32.mrb[0].mxu0
        %v1342 = vadd.f32 0.0, %v1341
        %v1343 = vpop.f32.mrb[0].mxu0
        %v1344 = vadd.f32 0.0, %v1343
        %1345 = vmatprep.mubr.f32.mxu0 0.0
        %1346 = vmatmul.mubr.f32.gmra.mrb[0].mxu0 %v1102
        %v1347 = vpop.f32.mrb[0].mxu0
        %v1348 = vadd.f32 0.0, %v1347
        %v1349 = vpop.f32.mrb[0].mxu0
        %v1350 = vadd.f32 0.0, %v1349
        %1351 = vmatprep.mubr.f32.mxu0 0.0
        %1352 = vmatmul.mubr.f32.gmra.mrb[0].mxu0 %v1105
        %v1353 = vpop.f32.mrb[0].mxu0
        %v1354 = vadd.f32 0.0, %v1353
        %v1355 = vpop.f32.mrb[0].mxu0
        %v1356 = vadd.f32 0.0, %v1355
        %1357 = vmatprep.mubr.f32.mxu0 0.0
        %1358 = vmatmul.mubr.f32.gmra.mrb[0].mxu0 %v1108
        %v1359 = vpop.f32.mrb[0].mxu0
        %v1360 = vadd.f32 0.0, %v1359
        %v1361 = vpop.f32.mrb[0].mxu0
        %v1362 = vadd.f32 0.0, %v1361
        %1363 = vmatprep.mubr.f32.mxu0 0.0
        %1364 = vmatmul.mubr.f32.gmra.mrb[0].mxu0 %v1111
        %v1365 = vpop.f32.mrb[0].mxu0
        %v1366 = vadd.f32 0.0, %v1365
        %v1367 = vpop.f32.mrb[0].mxu0
        %v1368 = vadd.f32 0.0, %v1367
        %1369 = vmatprep.mubr.f32.mxu0 0.0
        %1370 = vmatmul.mubr.f32.gmra.mrb[0].mxu0 %v1114
        %v1371 = vpop.f32.mrb[0].mxu0
        %v1372 = vadd.f32 0.0, %v1371
        %v1373 = vpop.f32.mrb[0].mxu0
        %v1374 = vadd.f32 0.0, %v1373
        %1375 = vmatprep.mubr.f32.mxu0 0.0
        %1376 = vmatmul.mubr.f32.gmra.mrb[0].mxu0 %v1117
        %v1377 = vpop.f32.mrb[0].mxu0
        %v1378 = vadd.f32 0.0, %v1377
        %v1379 = vpop.f32.mrb[0].mxu0
        %v1380 = vadd.f32 0.0, %v1379
        %1381 = vdwg.mxu0
        %v1382 = vmax.f32 %v1192, %v1194
        %1383 = vmax.xlane.f32.xlu0 %v1382
        %v1384 = vpop.xlane.xlu0 %1383
        %v1385 = vmax.f32 %v1198, %v1200
        %1386 = vmax.xlane.f32.xlu0 %v1385
        %v1387 = vpop.xlane.xlu0 %1386
        %v1388 = vmax.f32 %v1204, %v1206
        %1389 = vmax.xlane.f32.xlu0 %v1388
        %v1390 = vpop.xlane.xlu0 %1389
        %v1391 = vmax.f32 %v1210, %v1212
        %1392 = vmax.xlane.f32.xlu0 %v1391
        %v1393 = vpop.xlane.xlu0 %1392
        %v1394 = vmax.f32 %v1216, %v1218
        %1395 = vmax.xlane.f32.xlu0 %v1394
        %v1396 = vpop.xlane.xlu0 %1395
        %v1397 = vmax.f32 %v1222, %v1224
        %1398 = vmax.xlane.f32.xlu0 %v1397
        %v1399 = vpop.xlane.xlu0 %1398
        %v1400 = vmax.f32 %v1228, %v1230
        %1401 = vmax.xlane.f32.xlu0 %v1400
        %v1402 = vpop.xlane.xlu0 %1401
        %v1403 = vmax.f32 %v1234, %v1236
        %1404 = vmax.xlane.f32.xlu0 %v1403
        %v1405 = vpop.xlane.xlu0 %1404
        %v1406 = vmax.f32 %v1240, %v1242
        %1407 = vmax.xlane.f32.xlu0 %v1406
        %v1408 = vpop.xlane.xlu0 %1407
        %v1409 = vmax.f32 %v1246, %v1248
        %1410 = vmax.xlane.f32.xlu0 %v1409
        %v1411 = vpop.xlane.xlu0 %1410
        %v1412 = vmax.f32 %v1252, %v1254
        %1413 = vmax.xlane.f32.xlu0 %v1412
        %v1414 = vpop.xlane.xlu0 %1413
        %v1415 = vmax.f32 %v1258, %v1260
        %1416 = vmax.xlane.f32.xlu0 %v1415
        %v1417 = vpop.xlane.xlu0 %1416
        %v1418 = vmax.f32 %v1264, %v1266
        %1419 = vmax.xlane.f32.xlu0 %v1418
        %v1420 = vpop.xlane.xlu0 %1419
        %v1421 = vmax.f32 %v1270, %v1272
        %1422 = vmax.xlane.f32.xlu0 %v1421
        %v1423 = vpop.xlane.xlu0 %1422
        %v1424 = vmax.f32 %v1276, %v1278
        %1425 = vmax.xlane.f32.xlu0 %v1424
        %v1426 = vpop.xlane.xlu0 %1425
        %v1427 = vmax.f32 %v1282, %v1284
        %1428 = vmax.xlane.f32.xlu0 %v1427
        %v1429 = vpop.xlane.xlu0 %1428
        %v1430 = vmax.f32 %v1288, %v1290
        %1431 = vmax.xlane.f32.xlu0 %v1430
        %v1432 = vpop.xlane.xlu0 %1431
        %v1433 = vmax.f32 %v1294, %v1296
        %1434 = vmax.xlane.f32.xlu0 %v1433
        %v1435 = vpop.xlane.xlu0 %1434
        %v1436 = vmax.f32 %v1300, %v1302
        %1437 = vmax.xlane.f32.xlu0 %v1436
        %v1438 = vpop.xlane.xlu0 %1437
        %v1439 = vmax.f32 %v1306, %v1308
        %1440 = vmax.xlane.f32.xlu0 %v1439
        %v1441 = vpop.xlane.xlu0 %1440
        %v1442 = vmax.f32 %v1312, %v1314
        %1443 = vmax.xlane.f32.xlu0 %v1442
        %v1444 = vpop.xlane.xlu0 %1443
        %v1445 = vmax.f32 %v1318, %v1320
        %1446 = vmax.xlane.f32.xlu0 %v1445
        %v1447 = vpop.xlane.xlu0 %1446
        %v1448 = vmax.f32 %v1324, %v1326
        %1449 = vmax.xlane.f32.xlu0 %v1448
        %v1450 = vpop.xlane.xlu0 %1449
        %v1451 = vmax.f32 %v1330, %v1332
        %1452 = vmax.xlane.f32.xlu0 %v1451
        %v1453 = vpop.xlane.xlu0 %1452
        %v1454 = vmax.f32 %v1336, %v1338
        %1455 = vmax.xlane.f32.xlu0 %v1454
        %v1456 = vpop.xlane.xlu0 %1455
        %v1457 = vmax.f32 %v1342, %v1344
        %1458 = vmax.xlane.f32.xlu0 %v1457
        %v1459 = vpop.xlane.xlu0 %1458
        %v1460 = vmax.f32 %v1348, %v1350
        %1461 = vmax.xlane.f32.xlu0 %v1460
        %v1462 = vpop.xlane.xlu0 %1461
        %v1463 = vmax.f32 %v1354, %v1356
        %1464 = vmax.xlane.f32.xlu0 %v1463
        %v1465 = vpop.xlane.xlu0 %1464
        %v1466 = vmax.f32 %v1360, %v1362
        %1467 = vmax.xlane.f32.xlu0 %v1466
        %v1468 = vpop.xlane.xlu0 %1467
        %v1469 = vmax.f32 %v1366, %v1368
        %1470 = vmax.xlane.f32.xlu0 %v1469
        %v1471 = vpop.xlane.xlu0 %1470
        %v1472 = vmax.f32 %v1372, %v1374
        %1473 = vmax.xlane.f32.xlu0 %v1472
        %v1474 = vpop.xlane.xlu0 %1473
        %v1475 = vmax.f32 %v1378, %v1380
        %1476 = vmax.xlane.f32.xlu0 %v1475
        %v1477 = vpop.xlane.xlu0 %1476
        %v1478 = vsub.f32 %v1192, %v1384
        %v1479 = vsub.f32 %v1194, %v1384
        %v1480 = vsub.f32 %v1198, %v1387
        %v1481 = vsub.f32 %v1200, %v1387
        %v1482 = vsub.f32 %v1204, %v1390
        %v1483 = vsub.f32 %v1206, %v1390
        %v1484 = vsub.f32 %v1210, %v1393
        %v1485 = vsub.f32 %v1212, %v1393
        %v1486 = vsub.f32 %v1216, %v1396
        %v1487 = vsub.f32 %v1218, %v1396
        %v1488 = vsub.f32 %v1222, %v1399
        %v1489 = vsub.f32 %v1224, %v1399
        %v1490 = vsub.f32 %v1228, %v1402
        %v1491 = vsub.f32 %v1230, %v1402
        %v1492 = vsub.f32 %v1234, %v1405
        %v1493 = vsub.f32 %v1236, %v1405
        %v1494 = vsub.f32 %v1240, %v1408
        %v1495 = vsub.f32 %v1242, %v1408
        %v1496 = vsub.f32 %v1246, %v1411
        %v1497 = vsub.f32 %v1248, %v1411
        %v1498 = vsub.f32 %v1252, %v1414
        %v1499 = vsub.f32 %v1254, %v1414
        %v1500 = vsub.f32 %v1258, %v1417
        %v1501 = vsub.f32 %v1260, %v1417
        %v1502 = vsub.f32 %v1264, %v1420
        %v1503 = vsub.f32 %v1266, %v1420
        %v1504 = vsub.f32 %v1270, %v1423
        %v1505 = vsub.f32 %v1272, %v1423
        %v1506 = vsub.f32 %v1276, %v1426
        %v1507 = vsub.f32 %v1278, %v1426
        %v1508 = vsub.f32 %v1282, %v1429
        %v1509 = vsub.f32 %v1284, %v1429
        %v1510 = vsub.f32 %v1288, %v1432
        %v1511 = vsub.f32 %v1290, %v1432
        %v1512 = vsub.f32 %v1294, %v1435
        %v1513 = vsub.f32 %v1296, %v1435
        %v1514 = vsub.f32 %v1300, %v1438
        %v1515 = vsub.f32 %v1302, %v1438
        %v1516 = vsub.f32 %v1306, %v1441
        %v1517 = vsub.f32 %v1308, %v1441
        %v1518 = vsub.f32 %v1312, %v1444
        %v1519 = vsub.f32 %v1314, %v1444
        %v1520 = vsub.f32 %v1318, %v1447
        %v1521 = vsub.f32 %v1320, %v1447
        %v1522 = vsub.f32 %v1324, %v1450
        %v1523 = vsub.f32 %v1326, %v1450
        %v1524 = vsub.f32 %v1330, %v1453
        %v1525 = vsub.f32 %v1332, %v1453
        %v1526 = vsub.f32 %v1336, %v1456
        %v1527 = vsub.f32 %v1338, %v1456
        %v1528 = vsub.f32 %v1342, %v1459
        %v1529 = vsub.f32 %v1344, %v1459
        %v1530 = vsub.f32 %v1348, %v1462
        %v1531 = vsub.f32 %v1350, %v1462
        %v1532 = vsub.f32 %v1354, %v1465
        %v1533 = vsub.f32 %v1356, %v1465
        %v1534 = vsub.f32 %v1360, %v1468
        %v1535 = vsub.f32 %v1362, %v1468
        %v1536 = vsub.f32 %v1366, %v1471
        %v1537 = vsub.f32 %v1368, %v1471
        %v1538 = vsub.f32 %v1372, %v1474
        %v1539 = vsub.f32 %v1374, %v1474
        %v1540 = vsub.f32 %v1378, %v1477
        %v1541 = vsub.f32 %v1380, %v1477
        %v1542 = vmul.f32 %v1478, 1.442695
        %v1543 = vpow.pop %v1542
        %v1544 = vmul.f32 %v1479, 1.442695
        %v1545 = vpow.pop %v1544
        %v1546 = vmul.f32 %v1480, 1.442695
        %v1547 = vpow.pop %v1546
        %v1548 = vmul.f32 %v1481, 1.442695
        %v1549 = vpow.pop %v1548
        %v1550 = vmul.f32 %v1482, 1.442695
        %v1551 = vpow.pop %v1550
        %v1552 = vmul.f32 %v1483, 1.442695
        %v1553 = vpow.pop %v1552
        %v1554 = vmul.f32 %v1484, 1.442695
        %v1555 = vpow.pop %v1554
        %v1556 = vmul.f32 %v1485, 1.442695
        %v1557 = vpow.pop %v1556
        %v1558 = vmul.f32 %v1486, 1.442695
        %v1559 = vpow.pop %v1558
        %v1560 = vmul.f32 %v1487, 1.442695
        %v1561 = vpow.pop %v1560
        %v1562 = vmul.f32 %v1488, 1.442695
        %v1563 = vpow.pop %v1562
        %v1564 = vmul.f32 %v1489, 1.442695
        %v1565 = vpow.pop %v1564
        %v1566 = vmul.f32 %v1490, 1.442695
        %v1567 = vpow.pop %v1566
        %v1568 = vmul.f32 %v1491, 1.442695
        %v1569 = vpow.pop %v1568
        %v1570 = vmul.f32 %v1492, 1.442695
        %v1571 = vpow.pop %v1570
        %v1572 = vmul.f32 %v1493, 1.442695
        %v1573 = vpow.pop %v1572
        %v1574 = vmul.f32 %v1494, 1.442695
        %v1575 = vpow.pop %v1574
        %v1576 = vmul.f32 %v1495, 1.442695
        %v1577 = vpow.pop %v1576
        %v1578 = vmul.f32 %v1496, 1.442695
        %v1579 = vpow.pop %v1578
        %v1580 = vmul.f32 %v1497, 1.442695
        %v1581 = vpow.pop %v1580
        %v1582 = vmul.f32 %v1498, 1.442695
        %v1583 = vpow.pop %v1582
        %v1584 = vmul.f32 %v1499, 1.442695
        %v1585 = vpow.pop %v1584
        %v1586 = vmul.f32 %v1500, 1.442695
        %v1587 = vpow.pop %v1586
        %v1588 = vmul.f32 %v1501, 1.442695
        %v1589 = vpow.pop %v1588
        %v1590 = vmul.f32 %v1502, 1.442695
        %v1591 = vpow.pop %v1590
        %v1592 = vmul.f32 %v1503, 1.442695
        %v1593 = vpow.pop %v1592
        %v1594 = vmul.f32 %v1504, 1.442695
        %v1595 = vpow.pop %v1594
        %v1596 = vmul.f32 %v1505, 1.442695
        %v1597 = vpow.pop %v1596
        %v1598 = vmul.f32 %v1506, 1.442695
        %v1599 = vpow.pop %v1598
        %v1600 = vmul.f32 %v1507, 1.442695
        %v1601 = vpow.pop %v1600
        %v1602 = vmul.f32 %v1508, 1.442695
        %v1603 = vpow.pop %v1602
        %v1604 = vmul.f32 %v1509, 1.442695
        %v1605 = vpow.pop %v1604
        %v1606 = vmul.f32 %v1510, 1.442695
        %v1607 = vpow.pop %v1606
        %v1608 = vmul.f32 %v1511, 1.442695
        %v1609 = vpow.pop %v1608
        %v1610 = vmul.f32 %v1512, 1.442695
        %v1611 = vpow.pop %v1610
        %v1612 = vmul.f32 %v1513, 1.442695
        %v1613 = vpow.pop %v1612
        %v1614 = vmul.f32 %v1514, 1.442695
        %v1615 = vpow.pop %v1614
        %v1616 = vmul.f32 %v1515, 1.442695
        %v1617 = vpow.pop %v1616
        %v1618 = vmul.f32 %v1516, 1.442695
        %v1619 = vpow.pop %v1618
        %v1620 = vmul.f32 %v1517, 1.442695
        %v1621 = vpow.pop %v1620
        %v1622 = vmul.f32 %v1518, 1.442695
        %v1623 = vpow.pop %v1622
        %v1624 = vmul.f32 %v1519, 1.442695
        %v1625 = vpow.pop %v1624
        %v1626 = vmul.f32 %v1520, 1.442695
        %v1627 = vpow.pop %v1626
        %v1628 = vmul.f32 %v1521, 1.442695
        %v1629 = vpow.pop %v1628
        %v1630 = vmul.f32 %v1522, 1.442695
        %v1631 = vpow.pop %v1630
        %v1632 = vmul.f32 %v1523, 1.442695
        %v1633 = vpow.pop %v1632
        %v1634 = vmul.f32 %v1524, 1.442695
        %v1635 = vpow.pop %v1634
        %v1636 = vmul.f32 %v1525, 1.442695
        %v1637 = vpow.pop %v1636
        %v1638 = vmul.f32 %v1526, 1.442695
        %v1639 = vpow.pop %v1638
        %v1640 = vmul.f32 %v1527, 1.442695
        %v1641 = vpow.pop %v1640
        %v1642 = vmul.f32 %v1528, 1.442695
        %v1643 = vpow.pop %v1642
        %v1644 = vmul.f32 %v1529, 1.442695
        %v1645 = vpow.pop %v1644
        %v1646 = vmul.f32 %v1530, 1.442695
        %v1647 = vpow.pop %v1646
        %v1648 = vmul.f32 %v1531, 1.442695
        %v1649 = vpow.pop %v1648
        %v1650 = vmul.f32 %v1532, 1.442695
        %v1651 = vpow.pop %v1650
        %v1652 = vmul.f32 %v1533, 1.442695
        %v1653 = vpow.pop %v1652
        %v1654 = vmul.f32 %v1534, 1.442695
        %v1655 = vpow.pop %v1654
        %v1656 = vmul.f32 %v1535, 1.442695
        %v1657 = vpow.pop %v1656
        %v1658 = vmul.f32 %v1536, 1.442695
        %v1659 = vpow.pop %v1658
        %v1660 = vmul.f32 %v1537, 1.442695
        %v1661 = vpow.pop %v1660
        %v1662 = vmul.f32 %v1538, 1.442695
        %v1663 = vpow.pop %v1662
        %v1664 = vmul.f32 %v1539, 1.442695
        %v1665 = vpow.pop %v1664
        %v1666 = vmul.f32 %v1540, 1.442695
        %v1667 = vpow.pop %v1666
        %v1668 = vmul.f32 %v1541, 1.442695
        %v1669 = vpow.pop %v1668
        %v1670 = vadd.f32 %v1543, %v1545
        %1671 = vadd.xlane.f32.xlu0 %v1670
        %v1672 = vpop.xlane.xlu0 %1671
        %v1673 = vadd.f32 %v1547, %v1549
        %1674 = vadd.xlane.f32.xlu0 %v1673
        %v1675 = vpop.xlane.xlu0 %1674
        %v1676 = vadd.f32 %v1551, %v1553
        %1677 = vadd.xlane.f32.xlu0 %v1676
        %v1678 = vpop.xlane.xlu0 %1677
        %v1679 = vadd.f32 %v1555, %v1557
        %1680 = vadd.xlane.f32.xlu0 %v1679
        %v1681 = vpop.xlane.xlu0 %1680
        %v1682 = vadd.f32 %v1559, %v1561
        %1683 = vadd.xlane.f32.xlu0 %v1682
        %v1684 = vpop.xlane.xlu0 %1683
        %v1685 = vadd.f32 %v1563, %v1565
        %1686 = vadd.xlane.f32.xlu0 %v1685
        %v1687 = vpop.xlane.xlu0 %1686
        %v1688 = vadd.f32 %v1567, %v1569
        %1689 = vadd.xlane.f32.xlu0 %v1688
        %v1690 = vpop.xlane.xlu0 %1689
        %v1691 = vadd.f32 %v1571, %v1573
        %1692 = vadd.xlane.f32.xlu0 %v1691
        %v1693 = vpop.xlane.xlu0 %1692
        %v1694 = vadd.f32 %v1575, %v1577
        %1695 = vadd.xlane.f32.xlu0 %v1694
        %v1696 = vpop.xlane.xlu0 %1695
        %v1697 = vadd.f32 %v1579, %v1581
        %1698 = vadd.xlane.f32.xlu0 %v1697
        %v1699 = vpop.xlane.xlu0 %1698
        %v1700 = vadd.f32 %v1583, %v1585
        %1701 = vadd.xlane.f32.xlu0 %v1700
        %v1702 = vpop.xlane.xlu0 %1701
        %v1703 = vadd.f32 %v1587, %v1589
        %1704 = vadd.xlane.f32.xlu0 %v1703
        %v1705 = vpop.xlane.xlu0 %1704
        %v1706 = vadd.f32 %v1591, %v1593
        %1707 = vadd.xlane.f32.xlu0 %v1706
        %v1708 = vpop.xlane.xlu0 %1707
        %v1709 = vadd.f32 %v1595, %v1597
        %1710 = vadd.xlane.f32.xlu0 %v1709
        %v1711 = vpop.xlane.xlu0 %1710
        %v1712 = vadd.f32 %v1599, %v1601
        %1713 = vadd.xlane.f32.xlu0 %v1712
        %v1714 = vpop.xlane.xlu0 %1713
        %v1715 = vadd.f32 %v1603, %v1605
        %1716 = vadd.xlane.f32.xlu0 %v1715
        %v1717 = vpop.xlane.xlu0 %1716
        %v1718 = vadd.f32 %v1607, %v1609
        %1719 = vadd.xlane.f32.xlu0 %v1718
        %v1720 = vpop.xlane.xlu0 %1719
        %v1721 = vadd.f32 %v1611, %v1613
        %1722 = vadd.xlane.f32.xlu0 %v1721
        %v1723 = vpop.xlane.xlu0 %1722
        %v1724 = vadd.f32 %v1615, %v1617
        %1725 = vadd.xlane.f32.xlu0 %v1724
        %v1726 = vpop.xlane.xlu0 %1725
        %v1727 = vadd.f32 %v1619, %v1621
        %1728 = vadd.xlane.f32.xlu0 %v1727
        %v1729 = vpop.xlane.xlu0 %1728
        %v1730 = vadd.f32 %v1623, %v1625
        %1731 = vadd.xlane.f32.xlu0 %v1730
        %v1732 = vpop.xlane.xlu0 %1731
        %v1733 = vadd.f32 %v1627, %v1629
        %1734 = vadd.xlane.f32.xlu0 %v1733
        %v1735 = vpop.xlane.xlu0 %1734
        %v1736 = vadd.f32 %v1631, %v1633
        %1737 = vadd.xlane.f32.xlu0 %v1736
        %v1738 = vpop.xlane.xlu0 %1737
        %v1739 = vadd.f32 %v1635, %v1637
        %1740 = vadd.xlane.f32.xlu0 %v1739
        %v1741 = vpop.xlane.xlu0 %1740
        %v1742 = vadd.f32 %v1639, %v1641
        %1743 = vadd.xlane.f32.xlu0 %v1742
        %v1744 = vpop.xlane.xlu0 %1743
        %v1745 = vadd.f32 %v1643, %v1645
        %1746 = vadd.xlane.f32.xlu0 %v1745
        %v1747 = vpop.xlane.xlu0 %1746
        %v1748 = vadd.f32 %v1647, %v1649
        %1749 = vadd.xlane.f32.xlu0 %v1748
        %v1750 = vpop.xlane.xlu0 %1749
        %v1751 = vadd.f32 %v1651, %v1653
        %1752 = vadd.xlane.f32.xlu0 %v1751
        %v1753 = vpop.xlane.xlu0 %1752
        %v1754 = vadd.f32 %v1655, %v1657
        %1755 = vadd.xlane.f32.xlu0 %v1754
        %v1756 = vpop.xlane.xlu0 %1755
        %v1757 = vadd.f32 %v1659, %v1661
        %1758 = vadd.xlane.f32.xlu0 %v1757
        %v1759 = vpop.xlane.xlu0 %1758
        %v1760 = vadd.f32 %v1663, %v1665
        %1761 = vadd.xlane.f32.xlu0 %v1760
        %v1762 = vpop.xlane.xlu0 %1761
        %v1763 = vadd.f32 %v1667, %v1669
        %1764 = vadd.xlane.f32.xlu0 %v1763
        %v1765 = vpop.xlane.xlu0 %1764
        %v1766 = vrcp.pop %v1672
        %v1767 = vmul.f32 %v1543, %v1766
        %v1768 = vmul.f32 %v1545, %v1766
        %v1769 = vrcp.pop %v1675
        %v1770 = vmul.f32 %v1547, %v1769
        %v1771 = vmul.f32 %v1549, %v1769
        %v1772 = vrcp.pop %v1678
        %v1773 = vmul.f32 %v1551, %v1772
        %v1774 = vmul.f32 %v1553, %v1772
        %v1775 = vrcp.pop %v1681
        %v1776 = vmul.f32 %v1555, %v1775
        %v1777 = vmul.f32 %v1557, %v1775
        %v1778 = vrcp.pop %v1684
        %v1779 = vmul.f32 %v1559, %v1778
        %v1780 = vmul.f32 %v1561, %v1778
        %v1781 = vrcp.pop %v1687
        %v1782 = vmul.f32 %v1563, %v1781
        %v1783 = vmul.f32 %v1565, %v1781
        %v1784 = vrcp.pop %v1690
        %v1785 = vmul.f32 %v1567, %v1784
        %v1786 = vmul.f32 %v1569, %v1784
        %v1787 = vrcp.pop %v1693
        %v1788 = vmul.f32 %v1571, %v1787
        %v1789 = vmul.f32 %v1573, %v1787
        %v1790 = vrcp.pop %v1696
        %v1791 = vmul.f32 %v1575, %v1790
        %v1792 = vmul.f32 %v1577, %v1790
        %v1793 = vrcp.pop %v1699
        %v1794 = vmul.f32 %v1579, %v1793
        %v1795 = vmul.f32 %v1581, %v1793
        %v1796 = vrcp.pop %v1702
        %v1797 = vmul.f32 %v1583, %v1796
        %v1798 = vmul.f32 %v1585, %v1796
        %v1799 = vrcp.pop %v1705
        %v1800 = vmul.f32 %v1587, %v1799
        %v1801 = vmul.f32 %v1589, %v1799
        %v1802 = vrcp.pop %v1708
        %v1803 = vmul.f32 %v1591, %v1802
        %v1804 = vmul.f32 %v1593, %v1802
        %v1805 = vrcp.pop %v1711
        %v1806 = vmul.f32 %v1595, %v1805
        %v1807 = vmul.f32 %v1597, %v1805
        %v1808 = vrcp.pop %v1714
        %v1809 = vmul.f32 %v1599, %v1808
        %v1810 = vmul.f32 %v1601, %v1808
        %v1811 = vrcp.pop %v1717
        %v1812 = vmul.f32 %v1603, %v1811
        %v1813 = vmul.f32 %v1605, %v1811
        %v1814 = vrcp.pop %v1720
        %v1815 = vmul.f32 %v1607, %v1814
        %v1816 = vmul.f32 %v1609, %v1814
        %v1817 = vrcp.pop %v1723
        %v1818 = vmul.f32 %v1611, %v1817
        %v1819 = vmul.f32 %v1613, %v1817
        %v1820 = vrcp.pop %v1726
        %v1821 = vmul.f32 %v1615, %v1820
        %v1822 = vmul.f32 %v1617, %v1820
        %v1823 = vrcp.pop %v1729
        %v1824 = vmul.f32 %v1619, %v1823
        %v1825 = vmul.f32 %v1621, %v1823
        %v1826 = vrcp.pop %v1732
        %v1827 = vmul.f32 %v1623, %v1826
        %v1828 = vmul.f32 %v1625, %v1826
        %v1829 = vrcp.pop %v1735
        %v1830 = vmul.f32 %v1627, %v1829
        %v1831 = vmul.f32 %v1629, %v1829
        %v1832 = vrcp.pop %v1738
        %v1833 = vmul.f32 %v1631, %v1832
        %v1834 = vmul.f32 %v1633, %v1832
        %v1835 = vrcp.pop %v1741
        %v1836 = vmul.f32 %v1635, %v1835
        %v1837 = vmul.f32 %v1637, %v1835
        %v1838 = vrcp.pop %v1744
        %v1839 = vmul.f32 %v1639, %v1838
        %v1840 = vmul.f32 %v1641, %v1838
        %v1841 = vrcp.pop %v1747
        %v1842 = vmul.f32 %v1643, %v1841
        %v1843 = vmul.f32 %v1645, %v1841
        %v1844 = vrcp.pop %v1750
        %v1845 = vmul.f32 %v1647, %v1844
        %v1846 = vmul.f32 %v1649, %v1844
        %v1847 = vrcp.pop %v1753
        %v1848 = vmul.f32 %v1651, %v1847
        %v1849 = vmul.f32 %v1653, %v1847
        %v1850 = vrcp.pop %v1756
        %v1851 = vmul.f32 %v1655, %v1850
        %v1852 = vmul.f32 %v1657, %v1850
        %v1853 = vrcp.pop %v1759
        %v1854 = vmul.f32 %v1659, %v1853
        %v1855 = vmul.f32 %v1661, %v1853
        %v1856 = vrcp.pop %v1762
        %v1857 = vmul.f32 %v1663, %v1856
        %v1858 = vmul.f32 %v1665, %v1856
        %v1859 = vrcp.pop %v1765
        %v1860 = vmul.f32 %v1667, %v1859
        %v1861 = vmul.f32 %v1669, %v1859
        %1862 = vmatprep.subr.mxu0 %v1768
        %1863 = vmatpush1.msra.mxu0 %v1767
        %1864 = vmatprep.subr.mxu0 %v1771
        %1865 = vmatpush1.msra.mxu0 %v1770
        %1866 = vmatprep.subr.mxu0 %v1774
        %1867 = vmatpush1.msra.mxu0 %v1773
        %1868 = vmatprep.subr.mxu0 %v1777
        %1869 = vmatpush1.msra.mxu0 %v1776
        %1870 = vmatprep.subr.mxu0 %v1780
        %1871 = vmatpush1.msra.mxu0 %v1779
        %1872 = vmatprep.subr.mxu0 %v1783
        %1873 = vmatpush1.msra.mxu0 %v1782
        %1874 = vmatprep.subr.mxu0 %v1786
        %1875 = vmatpush1.msra.mxu0 %v1785
        %1876 = vmatprep.subr.mxu0 %v1789
        %1877 = vmatpush1.msra.mxu0 %v1788
        %1878 = vmatprep.subr.mxu0 %v1792
        %1879 = vmatpush1.msra.mxu0 %v1791
        %1880 = vmatprep.subr.mxu0 %v1795
        %1881 = vmatpush1.msra.mxu0 %v1794
        %1882 = vmatprep.subr.mxu0 %v1798
        %1883 = vmatpush1.msra.mxu0 %v1797
        %1884 = vmatprep.subr.mxu0 %v1801
        %1885 = vmatpush1.msra.mxu0 %v1800
        %1886 = vmatprep.subr.mxu0 %v1804
        %1887 = vmatpush1.msra.mxu0 %v1803
        %1888 = vmatprep.subr.mxu0 %v1807
        %1889 = vmatpush1.msra.mxu0 %v1806
        %1890 = vmatprep.subr.mxu0 %v1810
        %1891 = vmatpush1.msra.mxu0 %v1809
        %1892 = vmatprep.subr.mxu0 %v1813
        %1893 = vmatpush1.msra.mxu0 %v1812
        %1894 = vmatprep.subr.mxu0 %v1816
        %1895 = vmatpush1.msra.mxu0 %v1815
        %1896 = vmatprep.subr.mxu0 %v1819
        %1897 = vmatpush1.msra.mxu0 %v1818
        %1898 = vmatprep.subr.mxu0 %v1822
        %1899 = vmatpush1.msra.mxu0 %v1821
        %1900 = vmatprep.subr.mxu0 %v1825
        %1901 = vmatpush1.msra.mxu0 %v1824
        %1902 = vmatprep.subr.mxu0 %v1828
        %1903 = vmatpush1.msra.mxu0 %v1827
        %1904 = vmatprep.subr.mxu0 %v1831
        %1905 = vmatpush1.msra.mxu0 %v1830
        %1906 = vmatprep.subr.mxu0 %v1834
        %1907 = vmatpush1.msra.mxu0 %v1833
        %1908 = vmatprep.subr.mxu0 %v1837
        %1909 = vmatpush1.msra.mxu0 %v1836
        %1910 = vmatprep.subr.mxu0 %v1840
        %1911 = vmatpush1.msra.mxu0 %v1839
        %1912 = vmatprep.subr.mxu0 %v1843
        %1913 = vmatpush1.msra.mxu0 %v1842
        %1914 = vmatprep.subr.mxu0 %v1846
        %1915 = vmatpush1.msra.mxu0 %v1845
        %1916 = vmatprep.subr.mxu0 %v1849
        %1917 = vmatpush1.msra.mxu0 %v1848
        %1918 = vmatprep.subr.mxu0 %v1852
        %1919 = vmatpush1.msra.mxu0 %v1851
        %1920 = vmatprep.subr.mxu0 %v1855
        %1921 = vmatpush1.msra.mxu0 %v1854
        %1922 = vmatprep.subr.mxu0 %v1858
        %1923 = vmatpush1.msra.mxu0 %v1857
        %1924 = vmatprep.subr.mxu0 %v1861
        %1925 = vmatpush1.msra.mxu0 %v1860
        %1926 = vmatprep.mubr.f32.mxu0 %v957
        %1927 = vmatmul.mubr.f32.gmra.mrb[0].mxu0 %v955
        %v1928 = vpop.f32.mrb[0].mxu0
        %v1929 = vadd.f32 0.0, %v1928
        %v1930 = vpop.f32.mrb[0].mxu0
        %v1931 = vadd.f32 0.0, %v1930
        %1932 = vdwg.mxu0
        %v1933 = vld [vmem:[%s6] sm:$0xf]
        %v1935 = vsel %vm728, %v1933, 0
        %v1938 = vsel %vm642, %v1929, 0
        %v1941 = vsel %vm642, %v1931, 0
        %1943 = vmatprep.subr.mxu0 %v1941
        %1944 = vmatpush1.msra.mxu0 %v1938
        %1945 = vmatprep.subr.mxu0 0.0
        %1946 = vmatpush1.msra.mxu0 0.0
        %1947 = vmatprep.subr.mxu0 0.0
        %1948 = vmatpush1.msra.mxu0 0.0
        %1949 = vmatprep.subr.mxu0 0.0
        %1950 = vmatpush1.msra.mxu0 0.0
        %1951 = vmatprep.subr.mxu0 0.0
        %1952 = vmatpush1.msra.mxu0 0.0
        %1953 = vmatprep.subr.mxu0 0.0
        %1954 = vmatpush1.msra.mxu0 0.0
        %1955 = vmatprep.subr.mxu0 0.0
        %1956 = vmatpush1.msra.mxu0 0.0
        %1957 = vmatprep.subr.mxu0 0.0
        %1958 = vmatpush1.msra.mxu0 0.0
        %1959 = vmatprep.subr.mxu0 0.0
        %1960 = vmatpush1.msra.mxu0 0.0
        %1961 = vmatprep.subr.mxu0 0.0
        %1962 = vmatpush1.msra.mxu0 0.0
        %1963 = vmatprep.subr.mxu0 0.0
        %1964 = vmatpush1.msra.mxu0 0.0
        %1965 = vmatprep.subr.mxu0 0.0
        %1966 = vmatpush1.msra.mxu0 0.0
        %1967 = vmatprep.subr.mxu0 0.0
        %1968 = vmatpush1.msra.mxu0 0.0
        %1969 = vmatprep.subr.mxu0 0.0
        %1970 = vmatpush1.msra.mxu0 0.0
        %1971 = vmatprep.subr.mxu0 0.0
        %1972 = vmatpush1.msra.mxu0 0.0
        %1973 = vmatprep.subr.mxu0 0.0
        %1974 = vmatpush1.msra.mxu0 0.0
        %1975 = vmatprep.subr.mxu0 0.0
        %1976 = vmatpush1.msra.mxu0 0.0
        %1977 = vmatprep.subr.mxu0 0.0
        %1978 = vmatpush1.msra.mxu0 0.0
        %1979 = vmatprep.subr.mxu0 0.0
        %1980 = vmatpush1.msra.mxu0 0.0
        %1981 = vmatprep.subr.mxu0 0.0
        %1982 = vmatpush1.msra.mxu0 0.0
        %1983 = vmatprep.subr.mxu0 0.0
        %1984 = vmatpush1.msra.mxu0 0.0
        %1985 = vmatprep.subr.mxu0 0.0
        %1986 = vmatpush1.msra.mxu0 0.0
        %1987 = vmatprep.subr.mxu0 0.0
        %1988 = vmatpush1.msra.mxu0 0.0
        %1989 = vmatprep.subr.mxu0 0.0
        %1990 = vmatpush1.msra.mxu0 0.0
        %1991 = vmatprep.subr.mxu0 0.0
        %1992 = vmatpush1.msra.mxu0 0.0
        %1993 = vmatprep.subr.mxu0 0.0
        %1994 = vmatpush1.msra.mxu0 0.0
        %1995 = vmatprep.subr.mxu0 0.0
        %1996 = vmatpush1.msra.mxu0 0.0
        %1997 = vmatprep.subr.mxu0 0.0
        %1998 = vmatpush1.msra.mxu0 0.0
        %1999 = vmatprep.subr.mxu0 0.0
        %2000 = vmatpush1.msra.mxu0 0.0
        %2001 = vmatprep.subr.mxu0 0.0
        %2002 = vmatpush1.msra.mxu0 0.0
        %2003 = vmatprep.subr.mxu0 0.0
        %2004 = vmatpush1.msra.mxu0 0.0
        %2005 = vmatprep.subr.mxu0 0.0
        %2006 = vmatpush1.msra.mxu0 0.0
        %2007 = vmatprep.mubr.f32.mxu0 0.0
        %2008 = vmatmul.mubr.f32.gmra.mrb[0].mxu0 %v1935
        %v2009 = vpop.f32.mrb[0].mxu0
        %v2010 = vadd.f32 %v725, %v2009
        %v2011 = vpop.f32.mrb[0].mxu0
        %v2012 = vadd.f32 %v726, %v2011
        %2013 = vdwg.mxu0
        %v2014 = vadd.f32 %v2010, %v716
        %v2015 = vadd.f32 %v2012, %v718
        %v2016 = vld [vmem:[%s2] sm:$0xf]
        %2018 = vrot.lane.b32.xlu0 %v2015, 17
        %v2019 = vpop.permute.xlu0 %2018
        %2022 = vrot.lane.b32.xlu0 %v2014, 17
        %v2023 = vpop.permute.xlu0 %2022
        %v2024 = vsel %vm375, %v2023, %v2019
        %v2027 = vsel %vm375, %v2019, %v2023
        %v2028 = vld [vmem:[#allocation7] ss:$8 sm:$0x3]
        %v2030 = vlaneseq
        %v2031 = vshrl.u32 %v2030, 7
        %v2032 = vsub.s32 0, %v2031
        %v2033 = vrot.slane %v2028, %v2032
        %v2034 = vlaneseq
        %v2035 = vshrl.u32 %v2034, 7
        %v2036 = vsub.s32 1, %v2035
        %v2037 = vrot.slane %v2028, %v2036
        %v2040 = vmul.f32 %v2027, %v2033
        %v2041 = vmul.f32 %v2024, %v2037
        %2042 = vst [vmem:[#allocation2] sm:$0xf] %v2040
        %2043 = vst [vmem:[#allocation2 + $0x8] sm:$0xf] %v2041
        %2044 = vrot.lane.b32.xlu0 %v2015, 16
        %v2045 = vpop.permute.xlu0 %2044
        %2047 = vrot.lane.b32.xlu0 %v2014, 16
        %v2048 = vpop.permute.xlu0 %2047
        %v2049 = vsel %vm401, %v2048, %v2045
        %v2052 = vsel %vm401, %v2045, %v2048
        %v2053 = vld [vmem:[%s406] ss:$8 sm:$0x3]
        %v2055 = vlaneseq
        %v2056 = vshrl.u32 %v2055, 7
        %v2057 = vsub.s32 0, %v2056
        %v2058 = vrot.slane %v2053, %v2057
        %v2059 = vlaneseq
        %v2060 = vshrl.u32 %v2059, 7
        %v2061 = vsub.s32 1, %v2060
        %v2062 = vrot.slane %v2053, %v2061
        %v2065 = vmul.f32 %v2052, %v2058
        %v2066 = vmul.f32 %v2049, %v2062
        %v2069 = vrot.slane %v2065, 4
        %v2070 = vrot.slane %v2066, 4
        %2073 = vst [vmem:[#allocation2] sm:$0xf0] %v2069
        %2074 = vst [vmem:[#allocation2 + $0x8] sm:$0xf0] %v2070
        %2075 = vrot.lane.b32.xlu0 %v2015, 15
        %v2076 = vpop.permute.xlu0 %2075
        %2078 = vrot.lane.b32.xlu0 %v2014, 15
        %v2079 = vpop.permute.xlu0 %2078
        %v2080 = vsel %vm434, %v2079, %v2076
        %v2083 = vsel %vm434, %v2076, %v2079
        %v2084 = vld [vmem:[%s439] ss:$8 sm:$0x3]
        %v2086 = vlaneseq
        %v2087 = vshrl.u32 %v2086, 7
        %v2088 = vsub.s32 0, %v2087
        %v2089 = vrot.slane %v2084, %v2088
        %v2090 = vlaneseq
        %v2091 = vshrl.u32 %v2090, 7
        %v2092 = vsub.s32 1, %v2091
        %v2093 = vrot.slane %v2084, %v2092
        %v2096 = vmul.f32 %v2083, %v2089
        %v2097 = vmul.f32 %v2080, %v2093
        %2098 = vst [vmem:[#allocation2 + $0x10] sm:$0xf] %v2096
        %2099 = vst [vmem:[#allocation2 + $0x18] sm:$0xf] %v2097
        %2100 = vrot.lane.b32.xlu0 %v2015, 1
        %v2101 = vpop.permute.xlu0 %2100
        %2103 = vrot.lane.b32.xlu0 %v2014, 1
        %v2104 = vpop.permute.xlu0 %2103
        %v2105 = vsel %vm461, %v2104, %v2101
        %v2108 = vsel %vm461, %v2101, %v2104
        %v2109 = vld [vmem:[%s466] ss:$8 sm:$0x3]
        %v2111 = vlaneseq
        %v2112 = vshrl.u32 %v2111, 7
        %v2113 = vsub.s32 0, %v2112
        %v2114 = vrot.slane %v2109, %v2113
        %v2115 = vlaneseq
        %v2116 = vshrl.u32 %v2115, 7
        %v2117 = vsub.s32 1, %v2116
        %v2118 = vrot.slane %v2109, %v2117
        %v2121 = vmul.f32 %v2108, %v2114
        %v2122 = vmul.f32 %v2105, %v2118
        %v2125 = vrot.slane %v2121, 4
        %v2126 = vrot.slane %v2122, 4
        %2129 = vst [vmem:[#allocation2 + $0x10] sm:$0xf0] %v2125
        %2130 = vst [vmem:[#allocation2 + $0x18] sm:$0xf0] %v2126
        %v2131 = vld [vmem:[%s489] ss:$8 sm:$0x3]
        %v2133 = vlaneseq
        %v2134 = vshrl.u32 %v2133, 7
        %v2135 = vsub.s32 0, %v2134
        %v2136 = vrot.slane %v2131, %v2135
        %v2137 = vlaneseq
        %v2138 = vshrl.u32 %v2137, 7
        %v2139 = vsub.s32 1, %v2138
        %v2140 = vrot.slane %v2131, %v2139
        %v2143 = vmul.f32 %v2014, %v2136
        %v2144 = vmul.f32 %v2015, %v2140
        %2145 = vst [vmem:[#allocation2 + $0x20] sm:$0xf] %v2143
        %2146 = vst [vmem:[#allocation2 + $0x28] sm:$0xf] %v2144
        %2147 = vrot.lane.b32.xlu0 %v2014, 127
        %v2148 = vpop.permute.xlu0 %2147
        %2149 = vrot.lane.b32.xlu0 %v2015, 127
        %v2150 = vpop.permute.xlu0 %2149
        %v2151 = vsel %vm512, %v2148, %v2150
        %v2155 = vsel %vm512, %v2150, %v2148
        %v2156 = vld [vmem:[%s518] ss:$8 sm:$0x3]
        %v2158 = vlaneseq
        %v2159 = vshrl.u32 %v2158, 7
        %v2160 = vsub.s32 0, %v2159
        %v2161 = vrot.slane %v2156, %v2160
        %v2162 = vlaneseq
        %v2163 = vshrl.u32 %v2162, 7
        %v2164 = vsub.s32 1, %v2163
        %v2165 = vrot.slane %v2156, %v2164
        %v2168 = vmul.f32 %v2151, %v2161
        %v2169 = vmul.f32 %v2155, %v2165
        %v2172 = vrot.slane %v2168, 4
        %v2173 = vrot.slane %v2169, 4
        %2176 = vst [vmem:[#allocation2 + $0x20] sm:$0xf0] %v2172
        %2177 = vst [vmem:[#allocation2 + $0x28] sm:$0xf0] %v2173
        %2178 = vrot.lane.b32.xlu0 %v2014, 113
        %v2179 = vpop.permute.xlu0 %2178
        %2180 = vrot.lane.b32.xlu0 %v2015, 113
        %v2181 = vpop.permute.xlu0 %2180
        %v2182 = vsel %vm545, %v2179, %v2181
        %v2186 = vsel %vm545, %v2181, %v2179
        %v2187 = vld [vmem:[%s551] ss:$8 sm:$0x3]
        %v2189 = vlaneseq
        %v2190 = vshrl.u32 %v2189, 7
        %v2191 = vsub.s32 0, %v2190
        %v2192 = vrot.slane %v2187, %v2191
        %v2193 = vlaneseq
        %v2194 = vshrl.u32 %v2193, 7
        %v2195 = vsub.s32 1, %v2194
        %v2196 = vrot.slane %v2187, %v2195
        %v2199 = vmul.f32 %v2182, %v2192
        %v2200 = vmul.f32 %v2186, %v2196
        %2201 = vst [vmem:[#allocation2 + $0x30] sm:$0xf] %v2199
        %2202 = vst [vmem:[#allocation2 + $0x38] sm:$0xf] %v2200
        %2203 = vrot.lane.b32.xlu0 %v2014, 112
        %v2204 = vpop.permute.xlu0 %2203
        %2205 = vrot.lane.b32.xlu0 %v2015, 112
        %v2206 = vpop.permute.xlu0 %2205
        %v2207 = vsel %vm572, %v2204, %v2206
        %v2211 = vsel %vm572, %v2206, %v2204
        %v2212 = vld [vmem:[%s578] ss:$8 sm:$0x3]
        %v2214 = vlaneseq
        %v2215 = vshrl.u32 %v2214, 7
        %v2216 = vsub.s32 0, %v2215
        %v2217 = vrot.slane %v2212, %v2216
        %v2218 = vlaneseq
        %v2219 = vshrl.u32 %v2218, 7
        %v2220 = vsub.s32 1, %v2219
        %v2221 = vrot.slane %v2212, %v2220
        %v2224 = vmul.f32 %v2207, %v2217
        %v2225 = vmul.f32 %v2211, %v2221
        %v2228 = vrot.slane %v2224, 4
        %v2229 = vrot.slane %v2225, 4
        %2232 = vst [vmem:[#allocation2 + $0x30] sm:$0xf0] %v2228
        %2233 = vst [vmem:[#allocation2 + $0x38] sm:$0xf0] %v2229
        %2234 = vrot.lane.b32.xlu0 %v2014, 111
        %v2235 = vpop.permute.xlu0 %2234
        %2236 = vrot.lane.b32.xlu0 %v2015, 111
        %v2237 = vpop.permute.xlu0 %2236
        %v2238 = vsel %vm605, %v2235, %v2237
        %v2242 = vsel %vm605, %v2237, %v2235
        %v2243 = vld [vmem:[%s611] ss:$8 sm:$0x3]
        %v2245 = vlaneseq
        %v2246 = vshrl.u32 %v2245, 7
        %v2247 = vsub.s32 0, %v2246
        %v2248 = vrot.slane %v2243, %v2247
        %v2249 = vlaneseq
        %v2250 = vshrl.u32 %v2249, 7
        %v2251 = vsub.s32 1, %v2250
        %v2252 = vrot.slane %v2243, %v2251
        %v2255 = vmul.f32 %v2238, %v2248
        %v2256 = vmul.f32 %v2242, %v2252
        %2257 = vst [vmem:[#allocation2 + $0x40] sm:$0xf] %v2255
        %2258 = vst [vmem:[#allocation2 + $0x48] sm:$0xf] %v2256
        %v2259 = vld [vmem:[#allocation2] sm:$0xff]
        %v2260 = vld [vmem:[#allocation2 + $0x8] sm:$0xff]
        %v2261 = vld [vmem:[#allocation2 + $0x10] sm:$0xff]
        %v2262 = vld [vmem:[#allocation2 + $0x18] sm:$0xff]
        %v2263 = vld [vmem:[#allocation2 + $0x20] sm:$0xff]
        %v2264 = vld [vmem:[#allocation2 + $0x28] sm:$0xff]
        %v2265 = vld [vmem:[#allocation2 + $0x30] sm:$0xff]
        %v2266 = vld [vmem:[#allocation2 + $0x38] sm:$0xff]
        %v2267 = vld [vmem:[#allocation2 + $0x40] sm:$0xf]
        %v2268 = vld [vmem:[#allocation2 + $0x48] sm:$0xf]
        %v2270 = vsel %vm638, %v2016, 0
        %v2273 = vsel %vm642, %v2267, 0
        %v2276 = vsel %vm642, %v2268, 0
        %2278 = vmatprep.subr.mxu0 %v2260
        %2279 = vmatpush1.msra.mxu0 %v2259
        %2280 = vmatprep.subr.mxu0 %v2262
        %2281 = vmatpush1.msra.mxu0 %v2261
        %2282 = vmatprep.subr.mxu0 %v2264
        %2283 = vmatpush1.msra.mxu0 %v2263
        %2284 = vmatprep.subr.mxu0 %v2266
        %2285 = vmatpush1.msra.mxu0 %v2265
        %2286 = vmatprep.subr.mxu0 %v2276
        %2287 = vmatpush1.msra.mxu0 %v2273
        %2288 = vmatprep.subr.mxu0 0.0
        %2289 = vmatpush1.msra.mxu0 0.0
        %2290 = vmatprep.subr.mxu0 0.0
        %2291 = vmatpush1.msra.mxu0 0.0
        %2292 = vmatprep.subr.mxu0 0.0
        %2293 = vmatpush1.msra.mxu0 0.0
        %2294 = vmatprep.subr.mxu0 0.0
        %2295 = vmatpush1.msra.mxu0 0.0
        %2296 = vmatprep.subr.mxu0 0.0
        %2297 = vmatpush1.msra.mxu0 0.0
        %2298 = vmatprep.subr.mxu0 0.0
        %2299 = vmatpush1.msra.mxu0 0.0
        %2300 = vmatprep.subr.mxu0 0.0
        %2301 = vmatpush1.msra.mxu0 0.0
        %2302 = vmatprep.subr.mxu0 0.0
        %2303 = vmatpush1.msra.mxu0 0.0
        %2304 = vmatprep.subr.mxu0 0.0
        %2305 = vmatpush1.msra.mxu0 0.0
        %2306 = vmatprep.subr.mxu0 0.0
        %2307 = vmatpush1.msra.mxu0 0.0
        %2308 = vmatprep.subr.mxu0 0.0
        %2309 = vmatpush1.msra.mxu0 0.0
        %2310 = vmatprep.subr.mxu0 0.0
        %2311 = vmatpush1.msra.mxu0 0.0
        %2312 = vmatprep.subr.mxu0 0.0
        %2313 = vmatpush1.msra.mxu0 0.0
        %2314 = vmatprep.subr.mxu0 0.0
        %2315 = vmatpush1.msra.mxu0 0.0
        %2316 = vmatprep.subr.mxu0 0.0
        %2317 = vmatpush1.msra.mxu0 0.0
        %2318 = vmatprep.subr.mxu0 0.0
        %2319 = vmatpush1.msra.mxu0 0.0
        %2320 = vmatprep.subr.mxu0 0.0
        %2321 = vmatpush1.msra.mxu0 0.0
        %2322 = vmatprep.subr.mxu0 0.0
        %2323 = vmatpush1.msra.mxu0 0.0
        %2324 = vmatprep.subr.mxu0 0.0
        %2325 = vmatpush1.msra.mxu0 0.0
        %2326 = vmatprep.subr.mxu0 0.0
        %2327 = vmatpush1.msra.mxu0 0.0
        %2328 = vmatprep.subr.mxu0 0.0
        %2329 = vmatpush1.msra.mxu0 0.0
        %2330 = vmatprep.subr.mxu0 0.0
        %2331 = vmatpush1.msra.mxu0 0.0
        %2332 = vmatprep.subr.mxu0 0.0
        %2333 = vmatpush1.msra.mxu0 0.0
        %2334 = vmatprep.subr.mxu0 0.0
        %2335 = vmatpush1.msra.mxu0 0.0
        %2336 = vmatprep.subr.mxu0 0.0
        %2337 = vmatpush1.msra.mxu0 0.0
        %2338 = vmatprep.subr.mxu0 0.0
        %2339 = vmatpush1.msra.mxu0 0.0
        %2340 = vmatprep.subr.mxu0 0.0
        %2341 = vmatpush1.msra.mxu0 0.0
        %2342 = vmatprep.mubr.f32.mxu0 0.0
        %2343 = vmatmul.mubr.f32.gmra.mrb[0].mxu0 %v2270
        %v2344 = vpop.f32.mrb[0].mxu0
        %v2345 = vadd.f32 0.0, %v2344
        %v2346 = vpop.f32.mrb[0].mxu0
        %v2347 = vadd.f32 0.0, %v2346
        %2348 = vdwg.mxu0
        %vm2349 = vcmp.ge.f32.partialorder %v2345, 0.0
        %vm2350 = vcmp.ge.f32.partialorder %v2347, 0.0
        %v2351 = vmul.f32 %v722, %v2345
        %v2352 = vmul.f32 %v722, %v2347
        %v2353 = vsel %vm2349, %v2345, %v2351
        %v2354 = vsel %vm2350, %v2347, %v2352
        %v2357 = vcombine.low %v2353, %v2354
        %2359 = vst [vmem:[%s364] sm:$0xff] %v2357
        %s2360 = sand.u32 %s230, 1
        %s2361 = scalar_lea.sflag [#allocation6], %s2360
        %s2362 = sand.u32 %s230, 1
        %s2363 = smul.addr %s2362, 8
        %s2364 = scalar_lea.vmem [#allocation9], %s2363
        // Predicated region
        $region65: #{tpu_custom_call.1} parent=55 // pred_check
          %p2365 = pneg %p240
        $region66: #{tpu_custom_call.1} parent=55 // pred_check_branch
          %2367 = sbr.rel (%p2365) target = $region68
        $region67: #{tpu_custom_call.1} parent=55 // pred_region
          %s2369 = ssub.s32 128, 128
          %2370 = vsyncadd %s2361, %s2369
          %s2371 = smul.addr %s28, 2
          %s2372 = smul.addr %s2371, 64
          %s2373 = scalar_lea.hbm %s9, %s2372
          %s2375 = sshll.u32 %s2364, 4
          %s2376 = int_to_ptr.vmem [resolvable:$true] %s2375
          %2378 = dma.vmem_to_hbm [thread:$0]  %s2376, 128, %s2373, %s2361
        $region68: #{tpu_custom_call.1} parent=55 // pred_fallthru
          _
      $region56: #{tpu_custom_call.1} parent=5 // pred_fallthru
        _
      %p2379 = scmp.le.s32.totalorder 2, %s23
      // Predicated region
      $region69: #{tpu_custom_call.1} parent=5 // pred_check
        %p2380 = pneg %p2379
      $region70: #{tpu_custom_call.1} parent=5 // pred_check_branch
        %2382 = sbr.rel (%p2380) target = $region72
      $region71: #{tpu_custom_call.1} parent=5 // pred_region
        %s2383 = ssub.s32 %s23, 2
        // Predicated region
        $region73: #{tpu_custom_call.1} parent=71 // pred_check
          %p2384 = pneg %p246
        $region74: #{tpu_custom_call.1} parent=71 // pred_check_branch
          %2386 = sbr.rel (%p2384) target = $region76
        $region75: #{tpu_custom_call.1} parent=71 // pred_region
          %s2387 = sand.u32 %s231, 1
          %s2388 = scalar_lea.sflag [#allocation6], %s2387
          %s2389 = sand.u32 %s231, 1
          %s2390 = smul.addr %s2389, 8
          %s2391 = scalar_lea.vmem [#allocation9], %s2390
          %2392 = dma.done %s2388, 128
        $region76: #{tpu_custom_call.1} parent=71 // pred_fallthru
          _
      $region72: #{tpu_custom_call.1} parent=5 // pred_fallthru
        _
    $region6: #{tpu_custom_call.1} parent=1 // loop_footer
      %s27 = sadd.s32 1, %s23
    $region7: #{tpu_custom_call.1} parent=1 // loop_footer_branch
      %22 = sbr.rel target = $region3
    $region8: #{tpu_custom_call.1} parent=1 // loop_exit
      _
    %2393 = vsyncpa [#allocation5], 1
    %s2394 = scalar_lea.sflag [#allocation5], 1
    %2395 = vsyncpa %s2394, 1
    %2396 = vsyncpa [#allocation8], 1
    %2397 = vsyncpa [#allocation6], 1
    %s2398 = scalar_lea.sflag [#allocation6], 1
    %2399 = vsyncpa %s2398, 1

</llo_original>
